<compile_context>
chip_gen: v5e
topology: v5e:2x2
jax: 0.10.0
libtpu: 0.0.40
codegen_flags: <defaults>
</compile_context>

<pallas_src>
import functools

import jax
import jax.numpy as jnp
from jax import lax
from jax.experimental import pallas as pl
from jax.experimental.pallas import tpu as pltpu

EPS = 1e-5  # nn.GroupNorm default


def get_valid_group_count(num_channels):
    for g in reversed(range(1, num_channels + 1)):
        if num_channels % g == 0 and g <= 8:
            return g
    return 1


# --------------------------- in-kernel helpers --------------------------------------
def _gn_silu(x, gmat, w_row, b_row, inv_n, eps):
    """GroupNorm + SiLU on lane-dense x of shape (H, W*C).

    gmat is the precomputed (W*C, W*C) lane-level group-membership matrix; a
    single stacked (2, W*C) @ gmat matmul yields per-lane group sums of x and
    x*x (one MXU round trip per GroupNorm), already tiled along lanes."""
    s = jnp.concatenate(
        [jnp.sum(x, axis=0, keepdims=True),
         jnp.sum(x * x, axis=0, keepdims=True)], axis=0)          # (2, W*C)
    gs = jnp.dot(s, gmat, preferred_element_type=jnp.float32) * inv_n
    mean = gs[0:1, :]
    var = gs[1:2, :] - mean * mean                                 # one-pass var
    z = (x - mean) * lax.rsqrt(var + eps) * w_row + b_row
    return z * jax.nn.sigmoid(z)                                   # SiLU


def _conv3x3_banded(h, b_ref, m_top, m_bot):
    """3x3 'same' conv (no bias) on lane-dense h (H, W*Cin) -> (H, W*Cout).

    b_ref holds three banded weight matrices (one per dy tap); dx shifts and
    column zero-padding are baked into the bands, dy shifts are sublane rolls
    with the wrapped row zeroed by m_top / m_bot."""
    H = h.shape[0]
    acc = jnp.dot(h, b_ref[1], preferred_element_type=jnp.float32)          # dy = 0
    up = pltpu.roll(h, shift=1, axis=0) * m_top                             # row y sees h[y-1]
    acc = acc + jnp.dot(up, b_ref[0], preferred_element_type=jnp.float32)   # dy = -1
    dn = pltpu.roll(h, shift=H - 1, axis=0) * m_bot                         # row y sees h[y+1]
    acc = acc + jnp.dot(dn, b_ref[2], preferred_element_type=jnp.float32)   # dy = +1
    return acc


# --------------------------- fused ResBlock kernel ----------------------------------
def _resblock_kernel(x_ref, film_ref, gni_ref, gmi_ref, b1_ref,
                     gno_ref, gmo_ref, b2_ref, bout_ref, *rest,
                     inv_n_in, inv_n_out, has_proj, eps):
    if has_proj:
        rd_ref, o_ref = rest
    else:
        (o_ref,) = rest

    x = x_ref[0].astype(jnp.float32)                       # (H, W*Cin), lane-dense
    H = x.shape[0]

    # Row masks for the dy = +-1 taps — built once, shared by both convs.
    row = lax.broadcasted_iota(jnp.int32, (H, 1), 0)
    m_top = (row >= 1).astype(jnp.float32)                 # kills wrap of row 0
    m_bot = (row <= H - 2).astype(jnp.float32)             # kills wrap of row H-1

    # GroupNorm(in) + SiLU
    h = _gn_silu(x, gmi_ref[...], gni_ref[0:1, :], gni_ref[1:2, :], inv_n_in, eps)
    # conv_in (3x3, same); its bias is folded into the FiLM shift row
    h = _conv3x3_banded(h, b1_ref, m_top, m_bot)           # (H, W*Cout)
    # FiLM: h * (1 + gamma) + (beta + b1 * (1 + gamma)); rows precomputed per image
    film = film_ref[0]                                      # (2, W*Cout)
    h = h * film[0:1, :] + film[1:2, :]
    # GroupNorm(out) + SiLU
    h = _gn_silu(h, gmo_ref[...], gno_ref[0:1, :], gno_ref[1:2, :], inv_n_out, eps)
    # conv_out (3x3) + folded biases + residual branch
    y = _conv3x3_banded(h, b2_ref, m_top, m_bot) + bout_ref[...]
    if has_proj:
        y = y + jnp.dot(x, rd_ref[...], preferred_element_type=jnp.float32)
    else:
        y = y + x                                           # identity residual
    o_ref[0] = y.astype(o_ref.dtype)                        # lane-dense store


# --------------------------- wrapper-side weight re-layouts --------------------------
def _banded_conv_weights(w_hwio, W):
    """(3,3,Cin,Cout) HWIO -> (3, W*Cin, W*Cout): one banded matrix per dy tap.

    B[dy][xi*Cin+ci, xo*Cout+co] = w[dy, xi-xo+1, ci, co] if |xi-xo| <= 1 else 0."""
    cin, cout = w_hwio.shape[2], w_hwio.shape[3]
    xi = jnp.arange(W)[:, None]
    xo = jnp.arange(W)[None, :]
    diff = xi - xo                                          # (W, W)
    valid = jnp.abs(diff) <= 1
    dx_idx = jnp.clip(diff + 1, 0, 2)
    b = w_hwio[:, dx_idx]                                   # (3, W, W, Cin, Cout)
    b = jnp.where(valid[None, :, :, None, None], b, 0.0)
    b = jnp.transpose(b, (0, 1, 3, 2, 4))                   # (3, W, Cin, W, Cout)
    return b.reshape(3, W * cin, W * cout).astype(jnp.float32)


def _block_diag_1x1(rw, W):
    """(Cin, Cout) 1x1-conv weight -> block-diagonal (W*Cin, W*Cout)."""
    cin, cout = rw.shape
    eye = jnp.eye(W, dtype=jnp.float32)
    rd = eye[:, None, :, None] * rw.astype(jnp.float32)[None, :, None, :]
    return rd.reshape(W * cin, W * cout)


def _lane_group_matrix(C, groups, W):
    """(W*C, W*C) 0/1 matrix: lanes l1,l2 in the same GroupNorm group."""
    cg = C // groups
    gid = (jnp.arange(W * C) % C) // cg
    return (gid[:, None] == gid[None, :]).astype(jnp.float32)


def _tile_lanes(v, W):
    """Per-channel vector (C,) -> lane-tiled row (1, W*C): out[0, x*C+c] = v[c]."""
    return jnp.tile(v.reshape(1, -1).astype(jnp.float32), (1, W))


# --------------------------- main wrapper --------------------------------------------
def resblock_forward_lane_dense(params, x_flat, time_emb, H, W, cin):
    """Fused ResBlock on lane-dense activations x_flat of shape (N, H, W*Cin)."""
    N = x_flat.shape[0]
    cout = params["conv_in_w"].shape[3]
    g_in = get_valid_group_count(cin)
    g_out = get_valid_group_count(cout)
    has_proj = "res_w" in params
    f32 = jnp.float32

    # Weight re-layouts, group matrices, FiLM projection, lane tiling: all done
    # once in XLA (constant-folded under jit), never inside the hot kernel.
    b1 = _banded_conv_weights(params["conv_in_w"].astype(f32), W)
    b2 = _banded_conv_weights(params["conv_out_w"].astype(f32), W)
    gmat_in = _lane_group_matrix(cin, g_in, W)
    gmat_out = _lane_group_matrix(cout, g_out, W)
    gn_in = jnp.concatenate([_tile_lanes(params["norm_in_w"], W),
                             _tile_lanes(params["norm_in_b"], W)], axis=0)   # (2, W*Cin)
    gn_out = jnp.concatenate([_tile_lanes(params["norm_out_w"], W),
                              _tile_lanes(params["norm_out_b"], W)], axis=0)  # (2, W*Cout)

    # time_proj linear + FiLM coefficients in the wrapper (tiny); conv_in bias folded.
    proj = (time_emb.astype(f32) @ params["time_w"].astype(f32)
            + params["time_b"].astype(f32))                                   # (N, 2*Cout)
    gamma, beta = proj[:, :cout], proj[:, cout:]
    scale = 1.0 + gamma
    shift = beta + params["conv_in_b"].astype(f32)[None, :] * scale
    film = jnp.stack([jnp.tile(scale, (1, W)), jnp.tile(shift, (1, W))], axis=1)  # (N,2,W*Cout)

    bias_out = params["conv_out_b"].astype(f32)
    if has_proj:
        bias_out = bias_out + params["res_b"].astype(f32)
    bias_out = _tile_lanes(bias_out, W)                                       # (1, W*Cout)

    args = [x_flat, film, gn_in, gmat_in, b1, gn_out, gmat_out, b2, bias_out]
    in_specs = [
        pl.BlockSpec((1, H, W * cin), lambda n: (n, 0, 0)),
        pl.BlockSpec((1, 2, W * cout), lambda n: (n, 0, 0)),
        pl.BlockSpec((2, W * cin), lambda n: (0, 0)),
        pl.BlockSpec((W * cin, W * cin), lambda n: (0, 0)),
        pl.BlockSpec((3, W * cin, W * cout), lambda n: (0, 0, 0)),
        pl.BlockSpec((2, W * cout), lambda n: (0, 0)),
        pl.BlockSpec((W * cout, W * cout), lambda n: (0, 0)),
        pl.BlockSpec((3, W * cout, W * cout), lambda n: (0, 0, 0)),
        pl.BlockSpec((1, W * cout), lambda n: (0, 0)),
    ]
    if has_proj:
        args.append(_block_diag_1x1(params["res_w"], W))
        in_specs.append(pl.BlockSpec((W * cin, W * cout), lambda n: (0, 0)))

    kernel = functools.partial(
        _resblock_kernel,
        inv_n_in=1.0 / float(H * W * (cin // g_in)),
        inv_n_out=1.0 / float(H * W * (cout // g_out)),
        has_proj=has_proj, eps=EPS)

    return pl.pallas_call(
        kernel,
        out_shape=jax.ShapeDtypeStruct((N, H, W * cout), x_flat.dtype),
        grid_spec=pltpu.PrefetchScalarGridSpec(
            num_scalar_prefetch=0,
            grid=(N,),                                   # >= 2 programs -> both v7x cores
            in_specs=in_specs,
            out_specs=pl.BlockSpec((1, H, W * cout), lambda n: (n, 0, 0)),
        ),
        compiler_params=pltpu.CompilerParams(
            dimension_semantics=("parallel",),
            vmem_limit_bytes=32 * 1024 * 1024,
        ),
    )(*args)


def resblock_forward(params, x_nchw, time_emb):
    """NCHW-interface wrapper matching the PyTorch module.  Inside a network,
    keep activations lane-dense (N, H, W*C) and call resblock_forward_lane_dense
    directly to avoid the two HBM transposes here."""
    N, cin, H, W = x_nchw.shape
    cout = params["conv_in_w"].shape[3]
    x_flat = jnp.transpose(x_nchw, (0, 2, 3, 1)).reshape(N, H, W * cin)
    out = resblock_forward_lane_dense(params, x_flat, time_emb, H, W, cin)
    return jnp.transpose(out.reshape(N, H, W, cout), (0, 3, 1, 2))


# --------------------------- parameter init ------------------------------------------
def init_params(key, cin, cout, tdim, scale=0.1):
    ks = jax.random.split(key, 12)
    p = {
        "norm_in_w": 1.0 + scale * jax.random.normal(ks[0], (cin,), jnp.float32),
        "norm_in_b": scale * jax.random.normal(ks[1], (cin,), jnp.float32),
        "conv_in_w": scale * jax.random.normal(ks[2], (3, 3, cin, cout), jnp.float32),
        "conv_in_b": scale * jax.random.normal(ks[3], (cout,), jnp.float32),
        "time_w": scale * jax.random.normal(ks[4], (tdim, 2 * cout), jnp.float32),
        "time_b": scale * jax.random.normal(ks[5], (2 * cout,), jnp.float32),
        "norm_out_w": 1.0 + scale * jax.random.normal(ks[6], (cout,), jnp.float32),
        "norm_out_b": scale * jax.random.normal(ks[7], (cout,), jnp.float32),
        "conv_out_w": scale * jax.random.normal(ks[8], (3, 3, cout, cout), jnp.float32),
        "conv_out_b": scale * jax.random.normal(ks[9], (cout,), jnp.float32),
    }
    if cin != cout:
        p["res_w"] = scale * jax.random.normal(ks[10], (cin, cout), jnp.float32)
        p["res_b"] = scale * jax.random.normal(ks[11], (cout,), jnp.float32)
    return p


# --------------------------- pure-JAX reference --------------------------------------
def _ref_groupnorm(x, groups, w, b, eps=EPS):
    N, C, H, W = x.shape
    xg = x.reshape(N, groups, -1)
    mean = xg.mean(-1, keepdims=True)
    var = xg.var(-1, keepdims=True)
    xn = ((xg - mean) / jnp.sqrt(var + eps)).reshape(N, C, H, W)
    return xn * w[None, :, None, None] + b[None, :, None, None]


def ref_forward(params, x, t):
    silu = lambda v: v * jax.nn.sigmoid(v)
    dn = ("NCHW", "HWIO", "NCHW")
    Cin = x.shape[1]
    Cout = params["conv_in_w"].shape[3]
    h = silu(_ref_groupnorm(x, get_valid_group_count(Cin),
                            params["norm_in_w"], params["norm_in_b"]))
    h = lax.conv_general_dilated(h, params["conv_in_w"], (1, 1), "SAME",
                                 dimension_numbers=dn) + params["conv_in_b"][None, :, None, None]
    tp = t @ params["time_w"] + params["time_b"]
    gamma = tp[:, :Cout][:, :, None, None]
    beta = tp[:, Cout:][:, :, None, None]
    h = h * (1.0 + gamma) + beta
    h = silu(_ref_groupnorm(h, get_valid_group_count(Cout),
                            params["norm_out_w"], params["norm_out_b"]))
    h = lax.conv_general_dilated(h, params["conv_out_w"], (1, 1), "SAME",
                                 dimension_numbers=dn) + params["conv_out_b"][None, :, None, None]
    if "res_w" in params:
        res = lax.conv_general_dilated(
            x, params["res_w"].reshape(1, 1, Cin, Cout), (1, 1), "VALID",
            dimension_numbers=dn) + params["res_b"][None, :, None, None]
    else:
        res = x
    return h + res


if __name__ == "__main__":
    key = jax.random.PRNGKey(0)
    k1, k2, k3 = jax.random.split(key, 3)
    N, Cin, Cout, T, H, W = 2, 4, 8, 32, 16, 16
    x = jax.random.normal(k1, (N, Cin, H, W), jnp.float32)
    temb = jax.random.normal(k2, (N, T), jnp.float32)
    params = init_params(k3, Cin, Cout, T)

    out = jax.block_until_ready(resblock_forward(params, x, temb))
    ref = ref_forward(params, x, temb)
    assert out.shape == (N, Cout, H, W), out.shape
    max_err = float(jnp.max(jnp.abs(out - ref)))
    assert jnp.allclose(out, ref, atol=2e-3, rtol=2e-3), f"max_err={max_err}"

    # Identity-residual path (Cin == Cout).
    params2 = init_params(jax.random.PRNGKey(1), Cout, Cout, T)
    x2 = jax.random.normal(jax.random.PRNGKey(2), (N, Cout, H, W), jnp.float32)
    out2 = jax.block_until_ready(resblock_forward(params2, x2, temb))
    ref2 = ref_forward(params2, x2, temb)
    max_err2 = float(jnp.max(jnp.abs(out2 - ref2)))
    assert jnp.allclose(out2, ref2, atol=2e-3, rtol=2e-3), f"max_err2={max_err2}"

    print("KERNEL_OK")
</pallas_src>

<mosaic_0001>
module attributes {stable_mosaic.version = 11 : i64} {
  func.func @_resblock_kernel(%arg0: i32, %arg1: memref<1x16x64xf32, #tpu.memory_space<vmem>>, %arg2: memref<1x2x128xf32, #tpu.memory_space<vmem>>, %arg3: memref<2x64xf32, #tpu.memory_space<vmem>>, %arg4: memref<64x64xf32, #tpu.memory_space<vmem>>, %arg5: memref<3x64x128xf32, #tpu.memory_space<vmem>>, %arg6: memref<2x128xf32, #tpu.memory_space<vmem>>, %arg7: memref<128x128xf32, #tpu.memory_space<vmem>>, %arg8: memref<3x128x128xf32, #tpu.memory_space<vmem>>, %arg9: memref<1x128xf32, #tpu.memory_space<vmem>>, %arg10: memref<64x128xf32, #tpu.memory_space<vmem>>, %arg11: memref<1x16x128xf32, #tpu.memory_space<vmem>>) attributes {dimension_semantics = [#tpu.dimension_semantics<parallel>], iteration_bounds = array<i64: 2>, scalar_prefetch = 0 : i64, scratch_operands = 0 : i64, tpu.core_type = #tpu.core_type<tc>, window_params = [{transform_indices = @transform_0, window_bounds = array<i64: 1, 16, 64>}, {transform_indices = @transform_1, window_bounds = array<i64: 1, 2, 128>}, {pipeline_mode = #tpu.pipeline_mode<synchronous>, transform_indices = @transform_2, window_bounds = array<i64: 2, 64>}, {pipeline_mode = #tpu.pipeline_mode<synchronous>, transform_indices = @transform_3, window_bounds = array<i64: 64, 64>}, {pipeline_mode = #tpu.pipeline_mode<synchronous>, transform_indices = @transform_4, window_bounds = array<i64: 3, 64, 128>}, {pipeline_mode = #tpu.pipeline_mode<synchronous>, transform_indices = @transform_5, window_bounds = array<i64: 2, 128>}, {pipeline_mode = #tpu.pipeline_mode<synchronous>, transform_indices = @transform_6, window_bounds = array<i64: 128, 128>}, {pipeline_mode = #tpu.pipeline_mode<synchronous>, transform_indices = @transform_7, window_bounds = array<i64: 3, 128, 128>}, {pipeline_mode = #tpu.pipeline_mode<synchronous>, transform_indices = @transform_8, window_bounds = array<i64: 1, 128>}, {pipeline_mode = #tpu.pipeline_mode<synchronous>, transform_indices = @transform_9, window_bounds = array<i64: 64, 128>}, {transform_indices = @transform_10, window_bounds = array<i64: 1, 16, 128>}]} {
    %c0 = arith.constant 0 : index
    %c0_0 = arith.constant 0 : index
    %c0_1 = arith.constant 0 : index
    %0 = vector.load %arg1[%c0, %c0_0, %c0_1] : memref<1x16x64xf32, #tpu.memory_space<vmem>>, vector<1x16x64xf32>
    %1 = vector.shape_cast %0 : vector<1x16x64xf32> to vector<16x64xf32>
    %2 = tpu.iota {dimensions = array<i32: 0>} : vector<16x1xi32>
    %c1_i32 = arith.constant 1 : i32
    %3 = vector.broadcast %c1_i32 : i32 to vector<16x1xi32>
    %4 = arith.cmpi sge, %2, %3 : vector<16x1xi32>
    %5 = arith.extui %4 : vector<16x1xi1> to vector<16x1xi32>
    %6 = arith.sitofp %5 : vector<16x1xi32> to vector<16x1xf32>
    %c14_i32 = arith.constant 14 : i32
    %7 = vector.broadcast %c14_i32 : i32 to vector<16x1xi32>
    %8 = arith.cmpi sle, %2, %7 : vector<16x1xi32>
    %9 = arith.extui %8 : vector<16x1xi1> to vector<16x1xi32>
    %10 = arith.sitofp %9 : vector<16x1xi32> to vector<16x1xf32>
    %c0_2 = arith.constant 0 : index
    %c0_3 = arith.constant 0 : index
    %11 = vector.load %arg4[%c0_2, %c0_3] : memref<64x64xf32, #tpu.memory_space<vmem>>, vector<64x64xf32>
    %c0_4 = arith.constant 0 : index
    %c0_5 = arith.constant 0 : index
    %12 = vector.load %arg3[%c0_4, %c0_5] : memref<2x64xf32, #tpu.memory_space<vmem>>, vector<1x64xf32>
    %c1 = arith.constant 1 : index
    %c0_6 = arith.constant 0 : index
    %13 = vector.load %arg3[%c1, %c0_6] : memref<2x64xf32, #tpu.memory_space<vmem>>, vector<1x64xf32>
    %cst = arith.constant dense<0.000000e+00> : vector<64xf32>
    %14 = vector.multi_reduction <add>, %1, %cst [0] : vector<16x64xf32> to vector<64xf32>
    %15 = vector.shape_cast %14 : vector<64xf32> to vector<1x64xf32>
    %16 = arith.mulf %1, %1 : vector<16x64xf32>
    %cst_7 = arith.constant dense<0.000000e+00> : vector<64xf32>
    %17 = vector.multi_reduction <add>, %16, %cst_7 [0] : vector<16x64xf32> to vector<64xf32>
    %18 = vector.shape_cast %17 : vector<64xf32> to vector<1x64xf32>
    %19 = tpu.concatenate %15, %18 in 0 : vector<1x64xf32>, vector<1x64xf32> -> vector<2x64xf32>
    %cst_8 = arith.constant dense<0.000000e+00> : vector<2x64xf32>
    %20 = tpu.matmul %19, %11, %cst_8 {dimension_numbers = #tpu.dot_dimension_numbers<[1], [0], [0], [1], [0, 0, 1, 1], [], []>} : vector<2x64xf32>, vector<64x64xf32>, vector<2x64xf32> -> vector<2x64xf32>
    %cst_9 = arith.constant 3.906250e-03 : f32
    %21 = vector.broadcast %cst_9 : f32 to vector<2x64xf32>
    %22 = arith.mulf %20, %21 : vector<2x64xf32>
    %23 = vector.extract_strided_slice %22 {offsets = [0, 0], sizes = [1, 64], strides = [1, 1]} : vector<2x64xf32> to vector<1x64xf32>
    %24 = vector.extract_strided_slice %22 {offsets = [1, 0], sizes = [1, 64], strides = [1, 1]} : vector<2x64xf32> to vector<1x64xf32>
    %25 = arith.mulf %23, %23 : vector<1x64xf32>
    %26 = arith.subf %24, %25 : vector<1x64xf32>
    %27 = vector.broadcast %23 : vector<1x64xf32> to vector<16x64xf32>
    %28 = arith.subf %1, %27 : vector<16x64xf32>
    %cst_10 = arith.constant 9.99999974E-6 : f32
    %29 = vector.broadcast %cst_10 : f32 to vector<1x64xf32>
    %30 = arith.addf %26, %29 : vector<1x64xf32>
    %31 = math.rsqrt %30 : vector<1x64xf32>
    %32 = vector.broadcast %31 : vector<1x64xf32> to vector<16x64xf32>
    %33 = arith.mulf %28, %32 : vector<16x64xf32>
    %34 = vector.broadcast %12 : vector<1x64xf32> to vector<16x64xf32>
    %35 = arith.mulf %33, %34 : vector<16x64xf32>
    %36 = vector.broadcast %13 : vector<1x64xf32> to vector<16x64xf32>
    %37 = arith.addf %35, %36 : vector<16x64xf32>
    %38 = arith.negf %37 : vector<16x64xf32>
    %39 = math.exp %38 : vector<16x64xf32>
    %cst_11 = arith.constant 1.000000e+00 : f32
    %40 = vector.broadcast %cst_11 : f32 to vector<16x64xf32>
    %41 = arith.addf %40, %39 : vector<16x64xf32>
    %42 = arith.divf %40, %41 : vector<16x64xf32>
    %43 = arith.mulf %37, %42 : vector<16x64xf32>
    %c1_12 = arith.constant 1 : index
    %c0_13 = arith.constant 0 : index
    %c0_14 = arith.constant 0 : index
    %44 = vector.load %arg5[%c1_12, %c0_13, %c0_14] : memref<3x64x128xf32, #tpu.memory_space<vmem>>, vector<1x64x128xf32>
    %45 = vector.shape_cast %44 : vector<1x64x128xf32> to vector<64x128xf32>
    %cst_15 = arith.constant dense<0.000000e+00> : vector<16x128xf32>
    %46 = tpu.matmul %43, %45, %cst_15 {dimension_numbers = #tpu.dot_dimension_numbers<[1], [0], [0], [1], [0, 0, 1, 1], [], []>} : vector<16x64xf32>, vector<64x128xf32>, vector<16x128xf32> -> vector<16x128xf32>
    %c1_i32_16 = arith.constant 1 : i32
    %47 = tpu.dynamic_rotate %43 by %c1_i32_16 dim 0 : vector<16x64xf32>, i32 -> vector<16x64xf32>
    %48 = vector.broadcast %6 : vector<16x1xf32> to vector<16x64xf32>
    %49 = arith.mulf %47, %48 : vector<16x64xf32>
    %c0_17 = arith.constant 0 : index
    %c0_18 = arith.constant 0 : index
    %c0_19 = arith.constant 0 : index
    %50 = vector.load %arg5[%c0_17, %c0_18, %c0_19] : memref<3x64x128xf32, #tpu.memory_space<vmem>>, vector<1x64x128xf32>
    %51 = vector.shape_cast %50 : vector<1x64x128xf32> to vector<64x128xf32>
    %cst_20 = arith.constant dense<0.000000e+00> : vector<16x128xf32>
    %52 = tpu.matmul %49, %51, %cst_20 {dimension_numbers = #tpu.dot_dimension_numbers<[1], [0], [0], [1], [0, 0, 1, 1], [], []>} : vector<16x64xf32>, vector<64x128xf32>, vector<16x128xf32> -> vector<16x128xf32>
    %53 = arith.addf %46, %52 : vector<16x128xf32>
    %c15_i32 = arith.constant 15 : i32
    %54 = tpu.dynamic_rotate %43 by %c15_i32 dim 0 : vector<16x64xf32>, i32 -> vector<16x64xf32>
    %55 = vector.broadcast %10 : vector<16x1xf32> to vector<16x64xf32>
    %56 = arith.mulf %54, %55 : vector<16x64xf32>
    %c2 = arith.constant 2 : index
    %c0_21 = arith.constant 0 : index
    %c0_22 = arith.constant 0 : index
    %57 = vector.load %arg5[%c2, %c0_21, %c0_22] : memref<3x64x128xf32, #tpu.memory_space<vmem>>, vector<1x64x128xf32>
    %58 = vector.shape_cast %57 : vector<1x64x128xf32> to vector<64x128xf32>
    %cst_23 = arith.constant dense<0.000000e+00> : vector<16x128xf32>
    %59 = tpu.matmul %56, %58, %cst_23 {dimension_numbers = #tpu.dot_dimension_numbers<[1], [0], [0], [1], [0, 0, 1, 1], [], []>} : vector<16x64xf32>, vector<64x128xf32>, vector<16x128xf32> -> vector<16x128xf32>
    %60 = arith.addf %53, %59 : vector<16x128xf32>
    %c0_24 = arith.constant 0 : index
    %c0_25 = arith.constant 0 : index
    %c0_26 = arith.constant 0 : index
    %61 = vector.load %arg2[%c0_24, %c0_25, %c0_26] : memref<1x2x128xf32, #tpu.memory_space<vmem>>, vector<1x2x128xf32>
    %62 = vector.shape_cast %61 : vector<1x2x128xf32> to vector<2x128xf32>
    %63 = vector.extract_strided_slice %62 {offsets = [0, 0], sizes = [1, 128], strides = [1, 1]} : vector<2x128xf32> to vector<1x128xf32>
    %64 = vector.broadcast %63 : vector<1x128xf32> to vector<16x128xf32>
    %65 = arith.mulf %60, %64 : vector<16x128xf32>
    %66 = vector.extract_strided_slice %62 {offsets = [1, 0], sizes = [1, 128], strides = [1, 1]} : vector<2x128xf32> to vector<1x128xf32>
    %67 = vector.broadcast %66 : vector<1x128xf32> to vector<16x128xf32>
    %68 = arith.addf %65, %67 : vector<16x128xf32>
    %c0_27 = arith.constant 0 : index
    %c0_28 = arith.constant 0 : index
    %69 = vector.load %arg7[%c0_27, %c0_28] : memref<128x128xf32, #tpu.memory_space<vmem>>, vector<128x128xf32>
    %c0_29 = arith.constant 0 : index
    %c0_30 = arith.constant 0 : index
    %70 = vector.load %arg6[%c0_29, %c0_30] : memref<2x128xf32, #tpu.memory_space<vmem>>, vector<1x128xf32>
    %c1_31 = arith.constant 1 : index
    %c0_32 = arith.constant 0 : index
    %71 = vector.load %arg6[%c1_31, %c0_32] : memref<2x128xf32, #tpu.memory_space<vmem>>, vector<1x128xf32>
    %cst_33 = arith.constant dense<0.000000e+00> : vector<128xf32>
    %72 = vector.multi_reduction <add>, %68, %cst_33 [0] : vector<16x128xf32> to vector<128xf32>
    %73 = vector.shape_cast %72 : vector<128xf32> to vector<1x128xf32>
    %74 = arith.mulf %68, %68 : vector<16x128xf32>
    %cst_34 = arith.constant dense<0.000000e+00> : vector<128xf32>
    %75 = vector.multi_reduction <add>, %74, %cst_34 [0] : vector<16x128xf32> to vector<128xf32>
    %76 = vector.shape_cast %75 : vector<128xf32> to vector<1x128xf32>
    %77 = tpu.concatenate %73, %76 in 0 : vector<1x128xf32>, vector<1x128xf32> -> vector<2x128xf32>
    %cst_35 = arith.constant dense<0.000000e+00> : vector<2x128xf32>
    %78 = tpu.matmul %77, %69, %cst_35 {dimension_numbers = #tpu.dot_dimension_numbers<[1], [0], [0], [1], [0, 0, 1, 1], [], []>} : vector<2x128xf32>, vector<128x128xf32>, vector<2x128xf32> -> vector<2x128xf32>
    %cst_36 = arith.constant 3.906250e-03 : f32
    %79 = vector.broadcast %cst_36 : f32 to vector<2x128xf32>
    %80 = arith.mulf %78, %79 : vector<2x128xf32>
    %81 = vector.extract_strided_slice %80 {offsets = [0, 0], sizes = [1, 128], strides = [1, 1]} : vector<2x128xf32> to vector<1x128xf32>
    %82 = vector.extract_strided_slice %80 {offsets = [1, 0], sizes = [1, 128], strides = [1, 1]} : vector<2x128xf32> to vector<1x128xf32>
    %83 = arith.mulf %81, %81 : vector<1x128xf32>
    %84 = arith.subf %82, %83 : vector<1x128xf32>
    %85 = vector.broadcast %81 : vector<1x128xf32> to vector<16x128xf32>
    %86 = arith.subf %68, %85 : vector<16x128xf32>
    %cst_37 = arith.constant 9.99999974E-6 : f32
    %87 = vector.broadcast %cst_37 : f32 to vector<1x128xf32>
    %88 = arith.addf %84, %87 : vector<1x128xf32>
    %89 = math.rsqrt %88 : vector<1x128xf32>
    %90 = vector.broadcast %89 : vector<1x128xf32> to vector<16x128xf32>
    %91 = arith.mulf %86, %90 : vector<16x128xf32>
    %92 = vector.broadcast %70 : vector<1x128xf32> to vector<16x128xf32>
    %93 = arith.mulf %91, %92 : vector<16x128xf32>
    %94 = vector.broadcast %71 : vector<1x128xf32> to vector<16x128xf32>
    %95 = arith.addf %93, %94 : vector<16x128xf32>
    %96 = arith.negf %95 : vector<16x128xf32>
    %97 = math.exp %96 : vector<16x128xf32>
    %cst_38 = arith.constant 1.000000e+00 : f32
    %98 = vector.broadcast %cst_38 : f32 to vector<16x128xf32>
    %99 = arith.addf %98, %97 : vector<16x128xf32>
    %100 = arith.divf %98, %99 : vector<16x128xf32>
    %101 = arith.mulf %95, %100 : vector<16x128xf32>
    %c1_39 = arith.constant 1 : index
    %c0_40 = arith.constant 0 : index
    %c0_41 = arith.constant 0 : index
    %102 = vector.load %arg8[%c1_39, %c0_40, %c0_41] : memref<3x128x128xf32, #tpu.memory_space<vmem>>, vector<1x128x128xf32>
    %103 = vector.shape_cast %102 : vector<1x128x128xf32> to vector<128x128xf32>
    %cst_42 = arith.constant dense<0.000000e+00> : vector<16x128xf32>
    %104 = tpu.matmul %101, %103, %cst_42 {dimension_numbers = #tpu.dot_dimension_numbers<[1], [0], [0], [1], [0, 0, 1, 1], [], []>} : vector<16x128xf32>, vector<128x128xf32>, vector<16x128xf32> -> vector<16x128xf32>
    %c1_i32_43 = arith.constant 1 : i32
    %105 = tpu.dynamic_rotate %101 by %c1_i32_43 dim 0 : vector<16x128xf32>, i32 -> vector<16x128xf32>
    %106 = vector.broadcast %6 : vector<16x1xf32> to vector<16x128xf32>
    %107 = arith.mulf %105, %106 : vector<16x128xf32>
    %c0_44 = arith.constant 0 : index
    %c0_45 = arith.constant 0 : index
    %c0_46 = arith.constant 0 : index
    %108 = vector.load %arg8[%c0_44, %c0_45, %c0_46] : memref<3x128x128xf32, #tpu.memory_space<vmem>>, vector<1x128x128xf32>
    %109 = vector.shape_cast %108 : vector<1x128x128xf32> to vector<128x128xf32>
    %cst_47 = arith.constant dense<0.000000e+00> : vector<16x128xf32>
    %110 = tpu.matmul %107, %109, %cst_47 {dimension_numbers = #tpu.dot_dimension_numbers<[1], [0], [0], [1], [0, 0, 1, 1], [], []>} : vector<16x128xf32>, vector<128x128xf32>, vector<16x128xf32> -> vector<16x128xf32>
    %111 = arith.addf %104, %110 : vector<16x128xf32>
    %c15_i32_48 = arith.constant 15 : i32
    %112 = tpu.dynamic_rotate %101 by %c15_i32_48 dim 0 : vector<16x128xf32>, i32 -> vector<16x128xf32>
    %113 = vector.broadcast %10 : vector<16x1xf32> to vector<16x128xf32>
    %114 = arith.mulf %112, %113 : vector<16x128xf32>
    %c2_49 = arith.constant 2 : index
    %c0_50 = arith.constant 0 : index
    %c0_51 = arith.constant 0 : index
    %115 = vector.load %arg8[%c2_49, %c0_50, %c0_51] : memref<3x128x128xf32, #tpu.memory_space<vmem>>, vector<1x128x128xf32>
    %116 = vector.shape_cast %115 : vector<1x128x128xf32> to vector<128x128xf32>
    %cst_52 = arith.constant dense<0.000000e+00> : vector<16x128xf32>
    %117 = tpu.matmul %114, %116, %cst_52 {dimension_numbers = #tpu.dot_dimension_numbers<[1], [0], [0], [1], [0, 0, 1, 1], [], []>} : vector<16x128xf32>, vector<128x128xf32>, vector<16x128xf32> -> vector<16x128xf32>
    %118 = arith.addf %111, %117 : vector<16x128xf32>
    %c0_53 = arith.constant 0 : index
    %c0_54 = arith.constant 0 : index
    %119 = vector.load %arg9[%c0_53, %c0_54] : memref<1x128xf32, #tpu.memory_space<vmem>>, vector<1x128xf32>
    %120 = vector.broadcast %119 : vector<1x128xf32> to vector<16x128xf32>
    %121 = arith.addf %118, %120 : vector<16x128xf32>
    %c0_55 = arith.constant 0 : index
    %c0_56 = arith.constant 0 : index
    %122 = vector.load %arg10[%c0_55, %c0_56] : memref<64x128xf32, #tpu.memory_space<vmem>>, vector<64x128xf32>
    %cst_57 = arith.constant dense<0.000000e+00> : vector<16x128xf32>
    %123 = tpu.matmul %1, %122, %cst_57 {dimension_numbers = #tpu.dot_dimension_numbers<[1], [0], [0], [1], [0, 0, 1, 1], [], []>} : vector<16x64xf32>, vector<64x128xf32>, vector<16x128xf32> -> vector<16x128xf32>
    %124 = arith.addf %121, %123 : vector<16x128xf32>
    %c0_58 = arith.constant 0 : index
    %c0_59 = arith.constant 0 : index
    %c0_60 = arith.constant 0 : index
    %125 = vector.load %arg11[%c0_58, %c0_59, %c0_60] : memref<1x16x128xf32, #tpu.memory_space<vmem>>, vector<1x16x128xf32>
    %126 = vector.shape_cast %125 : vector<1x16x128xf32> to vector<16x128xf32>
    %127 = vector.shape_cast %124 : vector<16x128xf32> to vector<1x16x128xf32>
    tpu.vector_store %arg11[%c0_58, %c0_59, %c0_60], %127 {strides = array<i32>} : memref<1x16x128xf32, #tpu.memory_space<vmem>>, vector<1x16x128xf32>,
    return
  }
  func.func @transform_0(%arg0: i32) -> (i32, i32, i32) {
    %c0_i32 = arith.constant 0 : i32
    %c0_i32_0 = arith.constant 0 : i32
    %c0_i32_1 = arith.constant 0 : i32
    return %arg0, %c0_i32, %c0_i32_0 : i32, i32, i32
  }
  func.func @transform_1(%arg0: i32) -> (i32, i32, i32) {
    %c0_i32 = arith.constant 0 : i32
    %c0_i32_0 = arith.constant 0 : i32
    %c0_i32_1 = arith.constant 0 : i32
    return %arg0, %c0_i32, %c0_i32_0 : i32, i32, i32
  }
  func.func @transform_2(%arg0: i32) -> (i32, i32) {
    %c0_i32 = arith.constant 0 : i32
    %c0_i32_0 = arith.constant 0 : i32
    %c0_i32_1 = arith.constant 0 : i32
    return %c0_i32, %c0_i32_0 : i32, i32
  }
  func.func @transform_3(%arg0: i32) -> (i32, i32) {
    %c0_i32 = arith.constant 0 : i32
    %c0_i32_0 = arith.constant 0 : i32
    %c0_i32_1 = arith.constant 0 : i32
    return %c0_i32, %c0_i32_0 : i32, i32
  }
  func.func @transform_4(%arg0: i32) -> (i32, i32, i32) {
    %c0_i32 = arith.constant 0 : i32
    %c0_i32_0 = arith.constant 0 : i32
    %c0_i32_1 = arith.constant 0 : i32
    %c0_i32_2 = arith.constant 0 : i32
    return %c0_i32, %c0_i32_0, %c0_i32_1 : i32, i32, i32
  }
  func.func @transform_5(%arg0: i32) -> (i32, i32) {
    %c0_i32 = arith.constant 0 : i32
    %c0_i32_0 = arith.constant 0 : i32
    %c0_i32_1 = arith.constant 0 : i32
    return %c0_i32, %c0_i32_0 : i32, i32
  }
  func.func @transform_6(%arg0: i32) -> (i32, i32) {
    %c0_i32 = arith.constant 0 : i32
    %c0_i32_0 = arith.constant 0 : i32
    %c0_i32_1 = arith.constant 0 : i32
    return %c0_i32, %c0_i32_0 : i32, i32
  }
  func.func @transform_7(%arg0: i32) -> (i32, i32, i32) {
    %c0_i32 = arith.constant 0 : i32
    %c0_i32_0 = arith.constant 0 : i32
    %c0_i32_1 = arith.constant 0 : i32
    %c0_i32_2 = arith.constant 0 : i32
    return %c0_i32, %c0_i32_0, %c0_i32_1 : i32, i32, i32
  }
  func.func @transform_8(%arg0: i32) -> (i32, i32) {
    %c0_i32 = arith.constant 0 : i32
    %c0_i32_0 = arith.constant 0 : i32
    %c0_i32_1 = arith.constant 0 : i32
    return %c0_i32, %c0_i32_0 : i32, i32
  }
  func.func @transform_9(%arg0: i32) -> (i32, i32) {
    %c0_i32 = arith.constant 0 : i32
    %c0_i32_0 = arith.constant 0 : i32
    %c0_i32_1 = arith.constant 0 : i32
    return %c0_i32, %c0_i32_0 : i32, i32
  }
  func.func @transform_10(%arg0: i32) -> (i32, i32, i32) {
    %c0_i32 = arith.constant 0 : i32
    %c0_i32_0 = arith.constant 0 : i32
    %c0_i32_1 = arith.constant 0 : i32
    return %arg0, %c0_i32, %c0_i32_0 : i32, i32, i32
  }
}

</mosaic_0001>

<llo_original>
// kernel: tpu_custom_call.1
$region0: #{tpu_custom_call.1}
  #allocation0 [shape = 'u32[]', space=smem, size = 0x4, offset = 0x4, fixed_abs, tag = 'smem constant byte address 0x4 - core index']
  #allocation1 [shape = 'u32[72,128]{1,0:T(1,128)}', space=vmem, size = 0x9000, scoped, tag = 'internal scratch']
  %s0 = inlined_call_operand.hbm [shape: f32[2,16,64], index: 0, kind: input, shape index: {}]
  %s1 = inlined_call_operand.hbm [shape: f32[2,2,128], index: 1, kind: input, shape index: {}]
  %s2 = inlined_call_operand.hbm [shape: f32[2,64], index: 2, kind: input, shape index: {}]
  %s3 = inlined_call_operand.hbm [shape: f32[64,64], index: 3, kind: input, shape index: {}]
  %s4 = inlined_call_operand.hbm [shape: f32[3,64,128], index: 4, kind: input, shape index: {}]
  %s5 = inlined_call_operand.vmem [shape: f32[2,128], index: 5, kind: input, shape index: {}]
  %s6 = inlined_call_operand.hbm [shape: f32[128,128], index: 6, kind: input, shape index: {}]
  %s7 = inlined_call_operand.hbm [shape: f32[3,128,128], index: 7, kind: input, shape index: {}]
  %s8 = inlined_call_operand.vmem [shape: f32[1,128], index: 8, kind: input, shape index: {}]
  %s9 = inlined_call_operand.hbm [shape: f32[64,128], index: 9, kind: input, shape index: {}]
  %s10 = inlined_call_operand.hbm [shape: f32[2,16,128], index: 10, kind: output, shape index: {}]
  %s11 = sld [smem:[#allocation0]]
  $region105: #{tpu_custom_call.1} parent=0
    _
  %s13 = ssub.s32 1, %s11
  %s14 = scalar_select 0, %s13, %s11
  $region1: #{tpu_custom_call.1} parent=0
    #allocation2 [shape = 'u8[16384]{0}', space=vmem, size = 0x4000, scoped, tag = 'input window, operand 0']
    #allocation3 [shape = 's32[2]{0}', space=sflag, size = 0x8, scoped, tag = 'scoped memory for tpu_custom_call.1']
    #allocation4 [shape = 's32[2]{0}', space=sflag, size = 0x8, scoped, tag = 'scoped memory for tpu_custom_call.1']
    #allocation5 [shape = 'u8[2048]{0}', space=vmem, size = 0x800, scoped, tag = 'input window, operand 1']
    #allocation6 [shape = 's32[2]{0}', space=sflag, size = 0x8, scoped, tag = 'scoped memory for tpu_custom_call.1']
    #allocation7 [shape = 'u8[1024]{0}', space=vmem, size = 0x400, scoped, tag = 'input window, operand 2, single buffered']
    #allocation8 [shape = 'u8[32768]{0}', space=vmem, size = 0x8000, scoped, tag = 'input window, operand 3, single buffered']
    #allocation9 [shape = 's32[1]{0}', space=sflag, size = 0x4, scoped, tag = 'scoped memory for tpu_custom_call.1']
    #allocation10 [shape = 'u8[98304]{0}', space=vmem, size = 0x18000, scoped, tag = 'input window, operand 4, single buffered']
    #allocation11 [shape = 'u8[65536]{0}', space=vmem, size = 0x10000, scoped, tag = 'input window, operand 6, single buffered']
    #allocation12 [shape = 's32[1]{0}', space=sflag, size = 0x4, scoped, tag = 'scoped memory for tpu_custom_call.1']
    #allocation13 [shape = 'u8[196608]{0}', space=vmem, size = 0x30000, scoped, tag = 'input window, operand 7, single buffered']
    #allocation14 [shape = 'u8[32768]{0}', space=vmem, size = 0x8000, scoped, tag = 'input window, operand 9, single buffered']
    #allocation15 [shape = 's32[1]{0}', space=sflag, size = 0x4, scoped, tag = 'scoped memory for tpu_custom_call.1']
    #allocation16 [shape = 'u8[16384]{0}', space=vmem, size = 0x4000, scoped, tag = 'output window, operand 0']
    %15 = vsyncpa [#allocation3], 0
    %s16 = scalar_lea.sflag [#allocation3], 1
    %17 = vsyncpa %s16, 0
    %18 = vsyncpa [#allocation6], 0
    %s19 = scalar_lea.sflag [#allocation6], 1
    %20 = vsyncpa %s19, 0
    %21 = vsyncpa [#allocation9], 0
    %22 = vsyncpa [#allocation12], 0
    %23 = vsyncpa [#allocation15], 0
    %24 = vsyncpa [#allocation4], 0
    %s25 = scalar_lea.sflag [#allocation4], 1
    %26 = vsyncpa %s25, 0
    loop: start=0, step=1, limit=4
    $region2: #{tpu_custom_call.1} parent=1 // loop_pre_header
      _
    $region3: #{tpu_custom_call.1} parent=1 // loop_header
      %s28 = sphi 0, %s32
      %p29 = scmp.ge.s32.totalorder %s28, 4
      %s38 = sphi 0, %s40
      %s41 = sphi 0, %s38
      %s42 = sphi 0, %s41
      %s58 = sphi 0, %s42
      %s64 = sphi 0, %s66
      %s67 = sphi 0, %s64
      %s68 = sphi 0, %s67
      %s84 = sphi 0, %s68
      %s88 = sphi 0, %s88
      %s90 = sphi 0, %s88
      %s91 = sphi 0, %s90
      %s105 = sphi 0, %s91
      %s109 = sphi 0, %s109
      %s111 = sphi 0, %s109
      %s112 = sphi 0, %s111
      %s126 = sphi 0, %s112
      %s130 = sphi 0, %s130
      %s132 = sphi 0, %s130
      %s133 = sphi 0, %s132
      %s147 = sphi 0, %s133
      %s151 = sphi 0, %s151
      %s153 = sphi 0, %s151
      %s154 = sphi 0, %s153
      %s168 = sphi 0, %s154
      %s172 = sphi 0, %s172
      %s174 = sphi 0, %s172
      %s175 = sphi 0, %s174
      %s189 = sphi 0, %s175
      %s193 = sphi 0, %s193
      %s195 = sphi 0, %s193
      %s196 = sphi 0, %s195
      %s210 = sphi 0, %s196
      %s214 = sphi 0, %s214
      %s216 = sphi 0, %s214
      %s217 = sphi 0, %s216
      %s231 = sphi 0, %s217
      %s235 = sphi 0, %s235
      %s237 = sphi 0, %s235
      %s238 = sphi 0, %s237
      %s252 = sphi 0, %s238
      %s258 = sphi 0, %s260
      %s261 = sphi 0, %s258
      %s262 = sphi 0, %s261
      %s278 = sphi 0, %s262
    $region4: #{tpu_custom_call.1} parent=1 // loop_header_branch
      %31 = sbr.rel (%p29) target = $region8
    $region5: #{tpu_custom_call.1} parent=1 // loop_body
      %s33 = ssub.s32 %s28, 1
      %s34 = ssub.s32 %s28, 2
      %s35 = sadd.s32 %s28, 1
      %s36 = ssub.s32 %s28, %s35
      %p37 = scmp.eq.s32.totalorder %s36, 0
      %s39 = sadd.s32 %s38, 1
      %s40 = scalar_select %p37, %s38, %s39
      %p43 = pneg %p37
      %p44 = scmp.eq.s32.totalorder %s28, 1
      %p45 = por %p43, %p44
      %p46 = scmp.ne.s32.totalorder %s38, %s41
      %p47 = scmp.eq.s32.totalorder %s28, 0
      %p48 = por %p46, %p47
      %p49 = scmp.ne.s32.totalorder %s38, %s41
      %p50 = scmp.eq.s32.totalorder %s33, 1
      %p51 = por %p49, %p50
      %p52 = scmp.ne.s32.totalorder %s41, %s42
      %p53 = scmp.eq.s32.totalorder %s33, 0
      %p54 = por %p52, %p53
      %p55 = scmp.ne.s32.totalorder %s41, %s42
      %p56 = scmp.eq.s32.totalorder %s34, 1
      %p57 = por %p55, %p56
      %p59 = scmp.ne.s32.totalorder %s42, %s58
      %p60 = scmp.eq.s32.totalorder %s34, 0
      %p61 = por %p59, %p60
      %s62 = ssub.s32 %s28, %s35
      %p63 = scmp.eq.s32.totalorder %s62, 0
      %s65 = sadd.s32 %s64, 1
      %s66 = scalar_select %p63, %s64, %s65
      %p69 = pneg %p63
      %p70 = scmp.eq.s32.totalorder %s28, 1
      %p71 = por %p69, %p70
      %p72 = scmp.ne.s32.totalorder %s64, %s67
      %p73 = scmp.eq.s32.totalorder %s28, 0
      %p74 = por %p72, %p73
      %p75 = scmp.ne.s32.totalorder %s64, %s67
      %p76 = scmp.eq.s32.totalorder %s33, 1
      %p77 = por %p75, %p76
      %p78 = scmp.ne.s32.totalorder %s67, %s68
      %p79 = scmp.eq.s32.totalorder %s33, 0
      %p80 = por %p78, %p79
      %p81 = scmp.ne.s32.totalorder %s67, %s68
      %p82 = scmp.eq.s32.totalorder %s34, 1
      %p83 = por %p81, %p82
      %p85 = scmp.ne.s32.totalorder %s68, %s84
      %p86 = scmp.eq.s32.totalorder %s34, 0
      %p87 = por %p85, %p86
      %s89 = sadd.s32 %s88, 1
      %p92 = scmp.eq.s32.totalorder %s28, 1
      %p93 = scmp.ne.s32.totalorder %s88, %s90
      %p94 = scmp.eq.s32.totalorder %s28, 0
      %p95 = por %p93, %p94
      %p96 = scmp.ne.s32.totalorder %s88, %s90
      %p97 = scmp.eq.s32.totalorder %s33, 1
      %p98 = por %p96, %p97
      %p99 = scmp.ne.s32.totalorder %s90, %s91
      %p100 = scmp.eq.s32.totalorder %s33, 0
      %p101 = por %p99, %p100
      %p102 = scmp.ne.s32.totalorder %s90, %s91
      %p103 = scmp.eq.s32.totalorder %s34, 1
      %p104 = por %p102, %p103
      %p106 = scmp.ne.s32.totalorder %s91, %s105
      %p107 = scmp.eq.s32.totalorder %s34, 0
      %p108 = por %p106, %p107
      %s110 = sadd.s32 %s109, 1
      %p113 = scmp.eq.s32.totalorder %s28, 1
      %p114 = scmp.ne.s32.totalorder %s109, %s111
      %p115 = scmp.eq.s32.totalorder %s28, 0
      %p116 = por %p114, %p115
      %p117 = scmp.ne.s32.totalorder %s109, %s111
      %p118 = scmp.eq.s32.totalorder %s33, 1
      %p119 = por %p117, %p118
      %p120 = scmp.ne.s32.totalorder %s111, %s112
      %p121 = scmp.eq.s32.totalorder %s33, 0
      %p122 = por %p120, %p121
      %p123 = scmp.ne.s32.totalorder %s111, %s112
      %p124 = scmp.eq.s32.totalorder %s34, 1
      %p125 = por %p123, %p124
      %p127 = scmp.ne.s32.totalorder %s112, %s126
      %p128 = scmp.eq.s32.totalorder %s34, 0
      %p129 = por %p127, %p128
      %s131 = sadd.s32 %s130, 1
      %p134 = scmp.eq.s32.totalorder %s28, 1
      %p135 = scmp.ne.s32.totalorder %s130, %s132
      %p136 = scmp.eq.s32.totalorder %s28, 0
      %p137 = por %p135, %p136
      %p138 = scmp.ne.s32.totalorder %s130, %s132
      %p139 = scmp.eq.s32.totalorder %s33, 1
      %p140 = por %p138, %p139
      %p141 = scmp.ne.s32.totalorder %s132, %s133
      %p142 = scmp.eq.s32.totalorder %s33, 0
      %p143 = por %p141, %p142
      %p144 = scmp.ne.s32.totalorder %s132, %s133
      %p145 = scmp.eq.s32.totalorder %s34, 1
      %p146 = por %p144, %p145
      %p148 = scmp.ne.s32.totalorder %s133, %s147
      %p149 = scmp.eq.s32.totalorder %s34, 0
      %p150 = por %p148, %p149
      %s152 = sadd.s32 %s151, 1
      %p155 = scmp.eq.s32.totalorder %s28, 1
      %p156 = scmp.ne.s32.totalorder %s151, %s153
      %p157 = scmp.eq.s32.totalorder %s28, 0
      %p158 = por %p156, %p157
      %p159 = scmp.ne.s32.totalorder %s151, %s153
      %p160 = scmp.eq.s32.totalorder %s33, 1
      %p161 = por %p159, %p160
      %p162 = scmp.ne.s32.totalorder %s153, %s154
      %p163 = scmp.eq.s32.totalorder %s33, 0
      %p164 = por %p162, %p163
      %p165 = scmp.ne.s32.totalorder %s153, %s154
      %p166 = scmp.eq.s32.totalorder %s34, 1
      %p167 = por %p165, %p166
      %p169 = scmp.ne.s32.totalorder %s154, %s168
      %p170 = scmp.eq.s32.totalorder %s34, 0
      %p171 = por %p169, %p170
      %s173 = sadd.s32 %s172, 1
      %p176 = scmp.eq.s32.totalorder %s28, 1
      %p177 = scmp.ne.s32.totalorder %s172, %s174
      %p178 = scmp.eq.s32.totalorder %s28, 0
      %p179 = por %p177, %p178
      %p180 = scmp.ne.s32.totalorder %s172, %s174
      %p181 = scmp.eq.s32.totalorder %s33, 1
      %p182 = por %p180, %p181
      %p183 = scmp.ne.s32.totalorder %s174, %s175
      %p184 = scmp.eq.s32.totalorder %s33, 0
      %p185 = por %p183, %p184
      %p186 = scmp.ne.s32.totalorder %s174, %s175
      %p187 = scmp.eq.s32.totalorder %s34, 1
      %p188 = por %p186, %p187
      %p190 = scmp.ne.s32.totalorder %s175, %s189
      %p191 = scmp.eq.s32.totalorder %s34, 0
      %p192 = por %p190, %p191
      %s194 = sadd.s32 %s193, 1
      %p197 = scmp.eq.s32.totalorder %s28, 1
      %p198 = scmp.ne.s32.totalorder %s193, %s195
      %p199 = scmp.eq.s32.totalorder %s28, 0
      %p200 = por %p198, %p199
      %p201 = scmp.ne.s32.totalorder %s193, %s195
      %p202 = scmp.eq.s32.totalorder %s33, 1
      %p203 = por %p201, %p202
      %p204 = scmp.ne.s32.totalorder %s195, %s196
      %p205 = scmp.eq.s32.totalorder %s33, 0
      %p206 = por %p204, %p205
      %p207 = scmp.ne.s32.totalorder %s195, %s196
      %p208 = scmp.eq.s32.totalorder %s34, 1
      %p209 = por %p207, %p208
      %p211 = scmp.ne.s32.totalorder %s196, %s210
      %p212 = scmp.eq.s32.totalorder %s34, 0
      %p213 = por %p211, %p212
      %s215 = sadd.s32 %s214, 1
      %p218 = scmp.eq.s32.totalorder %s28, 1
      %p219 = scmp.ne.s32.totalorder %s214, %s216
      %p220 = scmp.eq.s32.totalorder %s28, 0
      %p221 = por %p219, %p220
      %p222 = scmp.ne.s32.totalorder %s214, %s216
      %p223 = scmp.eq.s32.totalorder %s33, 1
      %p224 = por %p222, %p223
      %p225 = scmp.ne.s32.totalorder %s216, %s217
      %p226 = scmp.eq.s32.totalorder %s33, 0
      %p227 = por %p225, %p226
      %p228 = scmp.ne.s32.totalorder %s216, %s217
      %p229 = scmp.eq.s32.totalorder %s34, 1
      %p230 = por %p228, %p229
      %p232 = scmp.ne.s32.totalorder %s217, %s231
      %p233 = scmp.eq.s32.totalorder %s34, 0
      %p234 = por %p232, %p233
      %s236 = sadd.s32 %s235, 1
      %p239 = scmp.eq.s32.totalorder %s28, 1
      %p240 = scmp.ne.s32.totalorder %s235, %s237
      %p241 = scmp.eq.s32.totalorder %s28, 0
      %p242 = por %p240, %p241
      %p243 = scmp.ne.s32.totalorder %s235, %s237
      %p244 = scmp.eq.s32.totalorder %s33, 1
      %p245 = por %p243, %p244
      %p246 = scmp.ne.s32.totalorder %s237, %s238
      %p247 = scmp.eq.s32.totalorder %s33, 0
      %p248 = por %p246, %p247
      %p249 = scmp.ne.s32.totalorder %s237, %s238
      %p250 = scmp.eq.s32.totalorder %s34, 1
      %p251 = por %p249, %p250
      %p253 = scmp.ne.s32.totalorder %s238, %s252
      %p254 = scmp.eq.s32.totalorder %s34, 0
      %p255 = por %p253, %p254
      %s256 = ssub.s32 %s28, %s35
      %p257 = scmp.eq.s32.totalorder %s256, 0
      %s259 = sadd.s32 %s258, 1
      %s260 = scalar_select %p257, %s258, %s259
      %p263 = pneg %p257
      %p264 = scmp.eq.s32.totalorder %s28, 1
      %p265 = por %p263, %p264
      %p266 = scmp.ne.s32.totalorder %s258, %s261
      %p267 = scmp.eq.s32.totalorder %s28, 0
      %p268 = por %p266, %p267
      %p269 = scmp.ne.s32.totalorder %s258, %s261
      %p270 = scmp.eq.s32.totalorder %s33, 1
      %p271 = por %p269, %p270
      %p272 = scmp.ne.s32.totalorder %s261, %s262
      %p273 = scmp.eq.s32.totalorder %s33, 0
      %p274 = por %p272, %p273
      %p275 = scmp.ne.s32.totalorder %s261, %s262
      %p276 = scmp.eq.s32.totalorder %s34, 1
      %p277 = por %p275, %p276
      %p279 = scmp.ne.s32.totalorder %s262, %s278
      %p280 = scmp.eq.s32.totalorder %s34, 0
      %p281 = por %p279, %p280
      %p282 = scmp.le.s32.totalorder 1, %s28
      %p283 = scmp.lt.s32.totalorder %s28, 3
      %p284 = pnand %p282, %p283
      %p285 = pneg %p284
      // Predicated region
      $region9: #{tpu_custom_call.1} parent=5 // pred_check
        _
      $region10: #{tpu_custom_call.1} parent=5 // pred_check_branch
        %287 = sbr.rel (%p284) target = $region12
      $region11: #{tpu_custom_call.1} parent=5 // pred_region
        %s288 = ssub.s32 %s28, 1
        // Predicated region
        $region13: #{tpu_custom_call.1} parent=11 // pred_check
          %p289 = pneg %p101
        $region14: #{tpu_custom_call.1} parent=11 // pred_check_branch
          %291 = sbr.rel (%p289) target = $region16
        $region15: #{tpu_custom_call.1} parent=11 // pred_region
          %293 = vsyncadd [#allocation6], 0
          %s295 = sshll.u32 %s2, 4
          %s296 = int_to_ptr.hbm [resolvable:$true] %s295
          %s297 = sshll.u32 [#allocation7], 4
          %s298 = int_to_ptr.vmem [resolvable:$true] %s297
          %300 = dma.hbm_to_vmem [thread:$0]  %s296, 32, %s298, [#allocation6]
        $region16: #{tpu_custom_call.1} parent=11 // pred_fallthru
          _
        // Predicated region
        $region17: #{tpu_custom_call.1} parent=11 // pred_check
          %p301 = pneg %p122
        $region18: #{tpu_custom_call.1} parent=11 // pred_check_branch
          %303 = sbr.rel (%p301) target = $region20
        $region19: #{tpu_custom_call.1} parent=11 // pred_region
          %305 = vsyncadd [#allocation9], 0
          %s306 = sshll.u32 %s3, 4
          %s307 = int_to_ptr.hbm [resolvable:$true] %s306
          %s308 = sshll.u32 [#allocation8], 4
          %s309 = int_to_ptr.vmem [resolvable:$true] %s308
          %314 = dma.hbm_to_vmem [thread:$0]  %s307, 1024, %s309, [#allocation9], 128, 128, 8
        $region20: #{tpu_custom_call.1} parent=11 // pred_fallthru
          _
        // Predicated region
        $region21: #{tpu_custom_call.1} parent=11 // pred_check
          %p315 = pneg %p143
        $region22: #{tpu_custom_call.1} parent=11 // pred_check_branch
          %317 = sbr.rel (%p315) target = $region24
        $region23: #{tpu_custom_call.1} parent=11 // pred_region
          %319 = vsyncadd [#allocation9], 0
          %s320 = sshll.u32 %s4, 4
          %s321 = int_to_ptr.hbm [resolvable:$true] %s320
          %s322 = sshll.u32 [#allocation10], 4
          %s323 = int_to_ptr.vmem [resolvable:$true] %s322
          %328 = dma.hbm_to_vmem [thread:$0]  %s321, 3072, %s323, [#allocation9], 128, 128, 8
        $region24: #{tpu_custom_call.1} parent=11 // pred_fallthru
          _
        // Predicated region
        $region25: #{tpu_custom_call.1} parent=11 // pred_check
          %p329 = pneg %p164
        $region26: #{tpu_custom_call.1} parent=11 // pred_check_branch
          %331 = sbr.rel (%p329) target = $region28
        $region27: #{tpu_custom_call.1} parent=11 // pred_region
          _
        $region28: #{tpu_custom_call.1} parent=11 // pred_fallthru
          _
        // Predicated region
        $region29: #{tpu_custom_call.1} parent=11 // pred_check
          %p332 = pneg %p185
        $region30: #{tpu_custom_call.1} parent=11 // pred_check_branch
          %334 = sbr.rel (%p332) target = $region32
        $region31: #{tpu_custom_call.1} parent=11 // pred_region
          %336 = vsyncadd [#allocation12], 0
          %s337 = sshll.u32 %s6, 4
          %s338 = int_to_ptr.hbm [resolvable:$true] %s337
          %s339 = sshll.u32 [#allocation11], 4
          %s340 = int_to_ptr.vmem [resolvable:$true] %s339
          %345 = dma.hbm_to_vmem [thread:$0]  %s338, 2048, %s340, [#allocation12], 128, 128, 8
        $region32: #{tpu_custom_call.1} parent=11 // pred_fallthru
          _
        // Predicated region
        $region33: #{tpu_custom_call.1} parent=11 // pred_check
          %p346 = pneg %p206
        $region34: #{tpu_custom_call.1} parent=11 // pred_check_branch
          %348 = sbr.rel (%p346) target = $region36
        $region35: #{tpu_custom_call.1} parent=11 // pred_region
          %350 = vsyncadd [#allocation12], 0
          %s351 = sshll.u32 %s7, 4
          %s352 = int_to_ptr.hbm [resolvable:$true] %s351
          %s353 = sshll.u32 [#allocation13], 4
          %s354 = int_to_ptr.vmem [resolvable:$true] %s353
          %359 = dma.hbm_to_vmem [thread:$0]  %s352, 6144, %s354, [#allocation12], 128, 128, 8
        $region36: #{tpu_custom_call.1} parent=11 // pred_fallthru
          _
        // Predicated region
        $region37: #{tpu_custom_call.1} parent=11 // pred_check
          %p360 = pneg %p227
        $region38: #{tpu_custom_call.1} parent=11 // pred_check_branch
          %362 = sbr.rel (%p360) target = $region40
        $region39: #{tpu_custom_call.1} parent=11 // pred_region
          _
        $region40: #{tpu_custom_call.1} parent=11 // pred_fallthru
          _
        // Predicated region
        $region41: #{tpu_custom_call.1} parent=11 // pred_check
          %p363 = pneg %p248
        $region42: #{tpu_custom_call.1} parent=11 // pred_check_branch
          %365 = sbr.rel (%p363) target = $region44
        $region43: #{tpu_custom_call.1} parent=11 // pred_region
          %367 = vsyncadd [#allocation15], 0
          %s368 = sshll.u32 %s9, 4
          %s369 = int_to_ptr.hbm [resolvable:$true] %s368
          %s370 = sshll.u32 [#allocation14], 4
          %s371 = int_to_ptr.vmem [resolvable:$true] %s370
          %376 = dma.hbm_to_vmem [thread:$0]  %s369, 1024, %s371, [#allocation15], 128, 128, 8
        $region44: #{tpu_custom_call.1} parent=11 // pred_fallthru
          _
      $region12: #{tpu_custom_call.1} parent=5 // pred_fallthru
        _
      %p377 = scmp.lt.s32.totalorder %s28, 2
      // Predicated region
      $region45: #{tpu_custom_call.1} parent=5 // pred_check
        %p378 = pneg %p377
      $region46: #{tpu_custom_call.1} parent=5 // pred_check_branch
        %380 = sbr.rel (%p378) target = $region48
      $region47: #{tpu_custom_call.1} parent=5 // pred_region
        // Predicated region
        $region49: #{tpu_custom_call.1} parent=47 // pred_check
          %p381 = pneg %p48
        $region50: #{tpu_custom_call.1} parent=47 // pred_check_branch
          %383 = sbr.rel (%p381) target = $region52
        $region51: #{tpu_custom_call.1} parent=47 // pred_region
          %s384 = sand.u32 %s38, 1
          %s385 = scalar_lea.sflag [#allocation3], %s384
          %s386 = sand.u32 %s38, 1
          %s387 = smul.addr %s386, 16
          %s388 = scalar_lea.vmem [#allocation2], %s387
          %390 = vsyncadd %s385, 0
          %s391 = smul.addr %s28, 2
          %s392 = smul.addr %s391, 8
          %s393 = scalar_lea.hbm %s0, %s392
          %s394 = sshll.u32 %s393, 4
          %s395 = int_to_ptr.hbm [resolvable:$true] %s394
          %s396 = sshll.u32 %s388, 4
          %s397 = int_to_ptr.vmem [resolvable:$true] %s396
          %402 = dma.hbm_to_vmem [thread:$0]  %s395, 256, %s397, %s385, 128, 128, 8
        $region52: #{tpu_custom_call.1} parent=47 // pred_fallthru
          _
        // Predicated region
        $region53: #{tpu_custom_call.1} parent=47 // pred_check
          %p403 = pneg %p74
        $region54: #{tpu_custom_call.1} parent=47 // pred_check_branch
          %405 = sbr.rel (%p403) target = $region56
        $region55: #{tpu_custom_call.1} parent=47 // pred_region
          %s406 = sand.u32 %s28, 1
          %s407 = scalar_lea.sflag [#allocation6], %s406
          %s408 = sand.u32 %s64, 1
          %s409 = smul.addr %s408, 2
          %s410 = scalar_lea.vmem [#allocation5], %s409
          %412 = vsyncadd %s407, 0
          %s413 = smul.addr %s28, 2
          %s414 = scalar_lea.hbm %s1, %s413
          %s416 = sshll.u32 %s414, 4
          %s417 = int_to_ptr.hbm [resolvable:$true] %s416
          %s418 = sshll.u32 %s410, 4
          %s419 = int_to_ptr.vmem [resolvable:$true] %s418
          %421 = dma.hbm_to_vmem [thread:$0]  %s417, 32, %s419, %s407
        $region56: #{tpu_custom_call.1} parent=47 // pred_fallthru
          _
      $region48: #{tpu_custom_call.1} parent=5 // pred_fallthru
        _
      %p422 = scmp.le.s32.totalorder 1, %s28
      %p423 = scmp.lt.s32.totalorder %s28, 3
      %p424 = pnand %p422, %p423
      %p425 = pneg %p424
      // Predicated region
      $region57: #{tpu_custom_call.1} parent=5 // pred_check
        _
      $region58: #{tpu_custom_call.1} parent=5 // pred_check_branch
        %427 = sbr.rel (%p424) target = $region60
      $region59: #{tpu_custom_call.1} parent=5 // pred_region
        %s428 = ssub.s32 %s28, 1
        %s429 = sand.u32 %s41, 1
        %s430 = scalar_lea.sflag [#allocation3], %s429
        %s431 = sand.u32 %s41, 1
        %s432 = smul.addr %s431, 16
        %s433 = scalar_lea.vmem [#allocation2], %s432
        // Predicated region
        $region61: #{tpu_custom_call.1} parent=59 // pred_check
          %p434 = pneg %p54
        $region62: #{tpu_custom_call.1} parent=59 // pred_check_branch
          %436 = sbr.rel (%p434) target = $region64
        $region63: #{tpu_custom_call.1} parent=59 // pred_region
          %438 = dma.done %s430, 256
        $region64: #{tpu_custom_call.1} parent=59 // pred_fallthru
          _
        %s439 = sand.u32 %s33, 1
        %s440 = scalar_lea.sflag [#allocation6], %s439
        %s441 = sand.u32 %s67, 1
        %s442 = smul.addr %s441, 2
        %s443 = scalar_lea.vmem [#allocation5], %s442
        // Predicated region
        $region65: #{tpu_custom_call.1} parent=59 // pred_check
          %p444 = pneg %p80
        $region66: #{tpu_custom_call.1} parent=59 // pred_check_branch
          %446 = sbr.rel (%p444) target = $region68
        $region67: #{tpu_custom_call.1} parent=59 // pred_region
          %448 = dma.done %s440, 32
        $region68: #{tpu_custom_call.1} parent=59 // pred_fallthru
          _
        // Predicated region
        $region69: #{tpu_custom_call.1} parent=59 // pred_check
          %p449 = pneg %p101
        $region70: #{tpu_custom_call.1} parent=59 // pred_check_branch
          %451 = sbr.rel (%p449) target = $region72
        $region71: #{tpu_custom_call.1} parent=59 // pred_region
          %453 = dma.done [#allocation6], 32
        $region72: #{tpu_custom_call.1} parent=59 // pred_fallthru
          _
        // Predicated region
        $region73: #{tpu_custom_call.1} parent=59 // pred_check
          %p454 = pneg %p122
        $region74: #{tpu_custom_call.1} parent=59 // pred_check_branch
          %456 = sbr.rel (%p454) target = $region76
        $region75: #{tpu_custom_call.1} parent=59 // pred_region
          %458 = dma.done [#allocation9], 1024
        $region76: #{tpu_custom_call.1} parent=59 // pred_fallthru
          _
        // Predicated region
        $region77: #{tpu_custom_call.1} parent=59 // pred_check
          %p459 = pneg %p143
        $region78: #{tpu_custom_call.1} parent=59 // pred_check_branch
          %461 = sbr.rel (%p459) target = $region80
        $region79: #{tpu_custom_call.1} parent=59 // pred_region
          %463 = dma.done [#allocation9], 3072
        $region80: #{tpu_custom_call.1} parent=59 // pred_fallthru
          _
        // Predicated region
        $region81: #{tpu_custom_call.1} parent=59 // pred_check
          %p464 = pneg %p185
        $region82: #{tpu_custom_call.1} parent=59 // pred_check_branch
          %466 = sbr.rel (%p464) target = $region84
        $region83: #{tpu_custom_call.1} parent=59 // pred_region
          %468 = dma.done [#allocation12], 2048
        $region84: #{tpu_custom_call.1} parent=59 // pred_fallthru
          _
        // Predicated region
        $region85: #{tpu_custom_call.1} parent=59 // pred_check
          %p469 = pneg %p206
        $region86: #{tpu_custom_call.1} parent=59 // pred_check_branch
          %471 = sbr.rel (%p469) target = $region88
        $region87: #{tpu_custom_call.1} parent=59 // pred_region
          %473 = dma.done [#allocation12], 6144
        $region88: #{tpu_custom_call.1} parent=59 // pred_fallthru
          _
        // Predicated region
        $region89: #{tpu_custom_call.1} parent=59 // pred_check
          %p474 = pneg %p248
        $region90: #{tpu_custom_call.1} parent=59 // pred_check_branch
          %476 = sbr.rel (%p474) target = $region92
        $region91: #{tpu_custom_call.1} parent=59 // pred_region
          %478 = dma.done [#allocation15], 1024
        $region92: #{tpu_custom_call.1} parent=59 // pred_fallthru
          _
        %s479 = sand.u32 %s41, 1
        %s480 = scalar_lea.sflag [#allocation3], %s479
        %s481 = sand.u32 %s41, 1
        %s482 = smul.addr %s481, 16
        %s483 = scalar_lea.vmem [#allocation2], %s482
        %p484 = pneg %p54
        %p485 = pneg %p51
        %s486 = sand.u32 %s33, 1
        %s487 = scalar_lea.sflag [#allocation6], %s486
        %s488 = sand.u32 %s67, 1
        %s489 = smul.addr %s488, 2
        %s490 = scalar_lea.vmem [#allocation5], %s489
        %p491 = pneg %p80
        %p492 = pneg %p77
        %p493 = pneg %p101
        %p494 = pneg %p98
        %p495 = pneg %p122
        %p496 = pneg %p119
        %p497 = pneg %p143
        %p498 = pneg %p140
        %p499 = pneg %p164
        %p500 = pneg %p161
        %p501 = pneg %p185
        %p502 = pneg %p182
        %p503 = pneg %p206
        %p504 = pneg %p203
        %p505 = pneg %p227
        %p506 = pneg %p224
        %p507 = pneg %p248
        %p508 = pneg %p245
        %p509 = pneg %p274
        %p510 = pneg %p271
        %s511 = sand.u32 %s261, 1
        %s512 = scalar_lea.sflag [#allocation4], %s511
        %s513 = sand.u32 %s261, 1
        %s514 = smul.addr %s513, 16
        %s515 = scalar_lea.vmem [#allocation16], %s514
        %v516 = vld [vmem:[%s433] sm:$0xff]
        %v517 = vld [vmem:[%s433 + $0x8] sm:$0xff]
        %v518 = vlaneseq
        %v519 = vshrl.u32 %v518, 7
        %v520 = vadd.s32 %v519, 8
        %vm521 = vcmp.ge.s32.totalorder %v519, 1
        %vm522 = vcmp.ge.s32.totalorder %v520, 1
        %v523 = vsel %vm521, 1, 0
        %v524 = vsel %vm522, 1, 0
        %v525 = vcvt.s32.f32 %v523
        %v526 = vcvt.s32.f32 %v524
        %vm527 = vcmp.le.s32.totalorder %v519, 14
        %vm528 = vcmp.le.s32.totalorder %v520, 14
        %v529 = vsel %vm527, 1, 0
        %v530 = vsel %vm528, 1, 0
        %v531 = vcvt.s32.f32 %v529
        %v532 = vcvt.s32.f32 %v530
        %v533 = vld [vmem:[#allocation8] sm:$0xff]
        %v534 = vld [vmem:[#allocation8 + $0x8] sm:$0xff]
        %v535 = vld [vmem:[#allocation8 + $0x10] sm:$0xff]
        %v536 = vld [vmem:[#allocation8 + $0x18] sm:$0xff]
        %v537 = vld [vmem:[#allocation8 + $0x20] sm:$0xff]
        %v538 = vld [vmem:[#allocation8 + $0x28] sm:$0xff]
        %v539 = vld [vmem:[#allocation8 + $0x30] sm:$0xff]
        %v540 = vld [vmem:[#allocation8 + $0x38] sm:$0xff]
        %v541 = vld [vmem:[#allocation7] sm:$0x1]
        %v542 = vld [vmem:[#allocation7 + $0x1] sm:$0x1]
        %vm543 = vcmask 523264
        %v544 = vsel %vm543, %v516, 0.0
        %v545 = vsel %vm543, %v517, 0.0
        %v546 = vadd.f32 %v544, %v545
        %v547 = vrot.slane %v546, 4
        %v548 = vadd.f32 %v546, %v547
        %v549 = vrot.slane %v548, 2
        %v550 = vadd.f32 %v548, %v549
        %v551 = vrot.slane %v550, 1
        %v552 = vadd.f32 %v550, %v551
        %v553 = vmul.f32 %v516, %v516
        %v554 = vmul.f32 %v517, %v517
        %v555 = vsel %vm543, %v553, 0.0
        %v556 = vsel %vm543, %v554, 0.0
        %v557 = vadd.f32 %v555, %v556
        %v558 = vrot.slane %v557, 4
        %v559 = vadd.f32 %v557, %v558
        %v560 = vrot.slane %v559, 2
        %v561 = vadd.f32 %v559, %v560
        %v562 = vrot.slane %v561, 1
        %v563 = vadd.f32 %v561, %v562
        %vm564 = vcmask 1040384
        %v565 = vsel %vm564, %v552, %v563
        %v567 = vsel %vm543, %v565, 0
        %569 = vmatpush.msra.mxu0 0.0
        %570 = vmatpush.msra.mxu0 0.0
        %571 = vmatpush.msra.mxu0 0.0
        %572 = vmatpush.msra.mxu0 0.0
        %573 = vmatpush.msra.mxu0 0.0
        %574 = vmatpush.msra.mxu0 0.0
        %575 = vmatpush.msra.mxu0 0.0
        %576 = vmatpush.msra.mxu0 0.0
        %577 = vmatpush.msra.mxu0 %v540
        %578 = vmatpush.msra.mxu0 %v539
        %579 = vmatpush.msra.mxu0 %v538
        %580 = vmatpush.msra.mxu0 %v537
        %581 = vmatpush.msra.mxu0 %v536
        %582 = vmatpush.msra.mxu0 %v535
        %583 = vmatpush.msra.mxu0 %v534
        %584 = vmatpush.msra.mxu0 %v533
        %585 = vmatmul.f32.gmra.mxu0 %v567
        %v586 = vpop.f32.mrf.mxu0
        %v587 = vadd.f32 0.0, %v586
        %588 = vdwg.mxu0
        %v589 = vmul.f32 %v587, 0.00390625
        %v590 = vmul.f32 %v589, %v589
        %v592 = vrot.slane %v590, 7
        %v594 = vsub.f32 %v589, %v592
        %v595 = vperm.slane %v589, 0
        %v596 = vsub.f32 %v516, %v595
        %v597 = vsub.f32 %v517, %v595
        %v598 = vadd.f32 %v594, 1e-05
        %v599 = vrsqrt.pop %v598
        %v600 = vmul.f32 %v599, %v598
        %v601 = vmul.f32 %v600, %v599
        %v602 = vmul.f32 0.5, %v601
        %v603 = vsub.f32 1.5, %v602
        %v604 = vmul.f32 %v599, %v603
        %vm605 = vweird.f32 %v598
        %vm606 = vweird.f32 %v599
        %vm607 = vmor %vm605, %vm606
        %v608 = vsel %vm607, %v599, %v604
        %v609 = vperm.slane %v608, 1
        %v610 = vmul.f32 %v596, %v609
        %v611 = vmul.f32 %v597, %v609
        %v612 = vperm.slane %v541, 0
        %v613 = vmul.f32 %v610, %v612
        %v614 = vmul.f32 %v611, %v612
        %v615 = vperm.slane %v542, 0
        %v616 = vadd.f32 %v613, %v615
        %v617 = vadd.f32 %v614, %v615
        %v618 = vxor.u32 %v616, 2147483648
        %v619 = vxor.u32 %v617, 2147483648
        %v620 = vmul.f32 %v618, 1.442695
        %v621 = vpow.pop %v620
        %v622 = vmul.f32 %v619, 1.442695
        %v623 = vpow.pop %v622
        %v624 = vadd.f32 %v621, 1.0
        %v625 = vadd.f32 %v623, 1.0
        %v626 = vrcp.pop %v624
        %v627 = vmul.f32 %v624, %v626
        %v628 = vsub.f32 1.0, %v627
        %v629 = vmul.f32 %v626, %v628
        %v630 = vadd.f32 %v626, %v629
        %vm631 = vweird.f32 %v624
        %vm632 = vweird.f32 %v626
        %vm633 = vmor %vm631, %vm632
        %v634 = vsel %vm633, %v626, %v630
        %v635 = vand.u32 2147483647, %v624
        %vm636 = vcmp.eq.f32.partialorder %v635, 8.507059e+37
        %v637 = vand.u32 %v624, 2147483648
        %v638 = vor.u32 1.1754944e-38, %v637
        %v639 = vsel %vm636, %v638, %v634
        %v640 = vmul.f32 1.0, %v639
        %v641 = vrcp.pop %v625
        %v642 = vmul.f32 %v625, %v641
        %v643 = vsub.f32 1.0, %v642
        %v644 = vmul.f32 %v641, %v643
        %v645 = vadd.f32 %v641, %v644
        %vm646 = vweird.f32 %v625
        %vm647 = vweird.f32 %v641
        %vm648 = vmor %vm646, %vm647
        %v649 = vsel %vm648, %v641, %v645
        %v650 = vand.u32 2147483647, %v625
        %vm651 = vcmp.eq.f32.partialorder %v650, 8.507059e+37
        %v652 = vand.u32 %v625, 2147483648
        %v653 = vor.u32 1.1754944e-38, %v652
        %v654 = vsel %vm651, %v653, %v649
        %v655 = vmul.f32 1.0, %v654
        %v656 = vmul.f32 %v616, %v640
        %v657 = vmul.f32 %v617, %v655
        %s658 = scalar_lea.vmem [#allocation10], 64
        %v659 = vld [vmem:[%s658] sm:$0xff]
        %v660 = vld [vmem:[%s658 + $0x8] sm:$0xff]
        %v661 = vld [vmem:[%s658 + $0x10] sm:$0xff]
        %v662 = vld [vmem:[%s658 + $0x18] sm:$0xff]
        %v663 = vld [vmem:[%s658 + $0x20] sm:$0xff]
        %v664 = vld [vmem:[%s658 + $0x28] sm:$0xff]
        %v665 = vld [vmem:[%s658 + $0x30] sm:$0xff]
        %v666 = vld [vmem:[%s658 + $0x38] sm:$0xff]
        %v667 = vrot.slane %v656, 7
        %v668 = vrot.slane %v657, 7
        %vm669 = vcmp.lt.s32.totalorder %v519, 1
        %v670 = vsel %vm669, %v667, %v668
        %v671 = vsel %vm669, %v668, %v667
        %v672 = vmul.f32 %v671, %v525
        %v673 = vmul.f32 %v670, %v526
        %v674 = vld [vmem:[#allocation10] sm:$0xff]
        %v675 = vld [vmem:[#allocation10 + $0x8] sm:$0xff]
        %v676 = vld [vmem:[#allocation10 + $0x10] sm:$0xff]
        %v677 = vld [vmem:[#allocation10 + $0x18] sm:$0xff]
        %v678 = vld [vmem:[#allocation10 + $0x20] sm:$0xff]
        %v679 = vld [vmem:[#allocation10 + $0x28] sm:$0xff]
        %v680 = vld [vmem:[#allocation10 + $0x30] sm:$0xff]
        %v681 = vld [vmem:[#allocation10 + $0x38] sm:$0xff]
        %v683 = vsel %vm543, %v672, 0
        %v686 = vsel %vm543, %v673, 0
        %688 = vmatpush.msra.mxu0 0.0
        %689 = vmatpush.msra.mxu0 0.0
        %690 = vmatpush.msra.mxu0 0.0
        %691 = vmatpush.msra.mxu0 0.0
        %692 = vmatpush.msra.mxu0 0.0
        %693 = vmatpush.msra.mxu0 0.0
        %694 = vmatpush.msra.mxu0 0.0
        %695 = vmatpush.msra.mxu0 0.0
        %696 = vmatpush.msra.mxu0 %v681
        %697 = vmatpush.msra.mxu0 %v680
        %698 = vmatpush.msra.mxu0 %v679
        %699 = vmatpush.msra.mxu0 %v678
        %700 = vmatpush.msra.mxu0 %v677
        %701 = vmatpush.msra.mxu0 %v676
        %702 = vmatpush.msra.mxu0 %v675
        %703 = vmatpush.msra.mxu0 %v674
        %704 = vmatmul.f32.gmra.mxu0 %v683
        %v705 = vpop.f32.mrf.mxu0
        %v706 = vadd.f32 0.0, %v705
        %707 = vmatmul.f32.gmra.mxu0 %v686
        %v708 = vpop.f32.mrf.mxu0
        %v709 = vadd.f32 0.0, %v708
        %710 = vdwg.mxu0
        %v712 = vsel %vm543, %v656, 0
        %v715 = vsel %vm543, %v657, 0
        %717 = vmatpush.msra.mxu0 0.0
        %718 = vmatpush.msra.mxu0 0.0
        %719 = vmatpush.msra.mxu0 0.0
        %720 = vmatpush.msra.mxu0 0.0
        %721 = vmatpush.msra.mxu0 0.0
        %722 = vmatpush.msra.mxu0 0.0
        %723 = vmatpush.msra.mxu0 0.0
        %724 = vmatpush.msra.mxu0 0.0
        %725 = vmatpush.msra.mxu0 %v666
        %726 = vmatpush.msra.mxu0 %v665
        %727 = vmatpush.msra.mxu0 %v664
        %728 = vmatpush.msra.mxu0 %v663
        %729 = vmatpush.msra.mxu0 %v662
        %730 = vmatpush.msra.mxu0 %v661
        %731 = vmatpush.msra.mxu0 %v660
        %732 = vmatpush.msra.mxu0 %v659
        %733 = vmatmul.f32.gmra.mxu0 %v712
        %v734 = vpop.f32.mrf.mxu0
        %v735 = vadd.f32 %v706, %v734
        %736 = vmatmul.f32.gmra.mxu0 %v715
        %v737 = vpop.f32.mrf.mxu0
        %v738 = vadd.f32 %v709, %v737
        %739 = vdwg.mxu0
        %v740 = vrot.slane %v656, 1
        %v741 = vrot.slane %v657, 1
        %vm742 = vcmp.lt.s32.totalorder %v519, 7
        %v743 = vsel %vm742, %v740, %v741
        %v744 = vsel %vm742, %v741, %v740
        %v745 = vmul.f32 %v743, %v531
        %v746 = vmul.f32 %v744, %v532
        %s747 = scalar_lea.vmem [#allocation10], 128
        %v748 = vld [vmem:[%s747] sm:$0xff]
        %v749 = vld [vmem:[%s747 + $0x8] sm:$0xff]
        %v750 = vld [vmem:[%s747 + $0x10] sm:$0xff]
        %v751 = vld [vmem:[%s747 + $0x18] sm:$0xff]
        %v752 = vld [vmem:[%s747 + $0x20] sm:$0xff]
        %v753 = vld [vmem:[%s747 + $0x28] sm:$0xff]
        %v754 = vld [vmem:[%s747 + $0x30] sm:$0xff]
        %v755 = vld [vmem:[%s747 + $0x38] sm:$0xff]
        %v757 = vsel %vm543, %v745, 0
        %v760 = vsel %vm543, %v746, 0
        %762 = vmatpush.msra.mxu0 0.0
        %763 = vmatpush.msra.mxu0 0.0
        %764 = vmatpush.msra.mxu0 0.0
        %765 = vmatpush.msra.mxu0 0.0
        %766 = vmatpush.msra.mxu0 0.0
        %767 = vmatpush.msra.mxu0 0.0
        %768 = vmatpush.msra.mxu0 0.0
        %769 = vmatpush.msra.mxu0 0.0
        %770 = vmatpush.msra.mxu0 %v755
        %771 = vmatpush.msra.mxu0 %v754
        %772 = vmatpush.msra.mxu0 %v753
        %773 = vmatpush.msra.mxu0 %v752
        %774 = vmatpush.msra.mxu0 %v751
        %775 = vmatpush.msra.mxu0 %v750
        %776 = vmatpush.msra.mxu0 %v749
        %777 = vmatpush.msra.mxu0 %v748
        %778 = vmatmul.f32.gmra.mxu0 %v757
        %v779 = vpop.f32.mrf.mxu0
        %v780 = vadd.f32 0.0, %v779
        %781 = vmatmul.f32.gmra.mxu0 %v760
        %v782 = vpop.f32.mrf.mxu0
        %v783 = vadd.f32 0.0, %v782
        %784 = vdwg.mxu0
        %v785 = vadd.f32 %v735, %v780
        %v786 = vadd.f32 %v738, %v783
        %v787 = vld [vmem:[%s443] sm:$0x3]
        %v788 = vperm.slane %v787, 0
        %v789 = vmul.f32 %v785, %v788
        %v790 = vmul.f32 %v786, %v788
        %v791 = vperm.slane %v787, 1
        %v792 = vadd.f32 %v789, %v791
        %v793 = vadd.f32 %v790, %v791
        %v794 = vld [vmem:[#allocation11] sm:$0xff]
        %v795 = vld [vmem:[#allocation11 + $0x8] sm:$0xff]
        %v796 = vld [vmem:[#allocation11 + $0x10] sm:$0xff]
        %v797 = vld [vmem:[#allocation11 + $0x18] sm:$0xff]
        %v798 = vld [vmem:[#allocation11 + $0x20] sm:$0xff]
        %v799 = vld [vmem:[#allocation11 + $0x28] sm:$0xff]
        %v800 = vld [vmem:[#allocation11 + $0x30] sm:$0xff]
        %v801 = vld [vmem:[#allocation11 + $0x38] sm:$0xff]
        %v802 = vld [vmem:[#allocation11 + $0x40] sm:$0xff]
        %v803 = vld [vmem:[#allocation11 + $0x48] sm:$0xff]
        %v804 = vld [vmem:[#allocation11 + $0x50] sm:$0xff]
        %v805 = vld [vmem:[#allocation11 + $0x58] sm:$0xff]
        %v806 = vld [vmem:[#allocation11 + $0x60] sm:$0xff]
        %v807 = vld [vmem:[#allocation11 + $0x68] sm:$0xff]
        %v808 = vld [vmem:[#allocation11 + $0x70] sm:$0xff]
        %v809 = vld [vmem:[#allocation11 + $0x78] sm:$0xff]
        %v810 = vld [vmem:[%s5] sm:$0x1]
        %v811 = vld [vmem:[%s5 + $0x1] sm:$0x1]
        %v812 = vadd.f32 %v792, %v793
        %v813 = vrot.slane %v812, 4
        %v814 = vadd.f32 %v812, %v813
        %v815 = vrot.slane %v814, 2
        %v816 = vadd.f32 %v814, %v815
        %v817 = vrot.slane %v816, 1
        %v818 = vadd.f32 %v816, %v817
        %v819 = vmul.f32 %v792, %v792
        %v820 = vmul.f32 %v793, %v793
        %v821 = vadd.f32 %v819, %v820
        %v822 = vrot.slane %v821, 4
        %v823 = vadd.f32 %v821, %v822
        %v824 = vrot.slane %v823, 2
        %v825 = vadd.f32 %v823, %v824
        %v826 = vrot.slane %v825, 1
        %v827 = vadd.f32 %v825, %v826
        %v828 = vsel %vm564, %v818, %v827
        %829 = vmatpush.msra.mxu0 %v809
        %830 = vmatpush.msra.mxu0 %v808
        %831 = vmatpush.msra.mxu0 %v807
        %832 = vmatpush.msra.mxu0 %v806
        %833 = vmatpush.msra.mxu0 %v805
        %834 = vmatpush.msra.mxu0 %v804
        %835 = vmatpush.msra.mxu0 %v803
        %836 = vmatpush.msra.mxu0 %v802
        %837 = vmatpush.msra.mxu0 %v801
        %838 = vmatpush.msra.mxu0 %v800
        %839 = vmatpush.msra.mxu0 %v799
        %840 = vmatpush.msra.mxu0 %v798
        %841 = vmatpush.msra.mxu0 %v797
        %842 = vmatpush.msra.mxu0 %v796
        %843 = vmatpush.msra.mxu0 %v795
        %844 = vmatpush.msra.mxu0 %v794
        %845 = vmatmul.f32.gmra.mxu0 %v828
        %v846 = vpop.f32.mrf.mxu0
        %v847 = vadd.f32 0.0, %v846
        %848 = vdwg.mxu0
        %v849 = vmul.f32 %v847, 0.00390625
        %v850 = vmul.f32 %v849, %v849
        %v852 = vrot.slane %v850, 7
        %v854 = vsub.f32 %v849, %v852
        %v855 = vperm.slane %v849, 0
        %v856 = vsub.f32 %v792, %v855
        %v857 = vsub.f32 %v793, %v855
        %v858 = vadd.f32 %v854, 1e-05
        %v859 = vrsqrt.pop %v858
        %v860 = vmul.f32 %v859, %v858
        %v861 = vmul.f32 %v860, %v859
        %v862 = vmul.f32 0.5, %v861
        %v863 = vsub.f32 1.5, %v862
        %v864 = vmul.f32 %v859, %v863
        %vm865 = vweird.f32 %v858
        %vm866 = vweird.f32 %v859
        %vm867 = vmor %vm865, %vm866
        %v868 = vsel %vm867, %v859, %v864
        %v869 = vperm.slane %v868, 1
        %v870 = vmul.f32 %v856, %v869
        %v871 = vmul.f32 %v857, %v869
        %v872 = vperm.slane %v810, 0
        %v873 = vmul.f32 %v870, %v872
        %v874 = vmul.f32 %v871, %v872
        %v875 = vperm.slane %v811, 0
        %v876 = vadd.f32 %v873, %v875
        %v877 = vadd.f32 %v874, %v875
        %v878 = vxor.u32 %v876, 2147483648
        %v879 = vxor.u32 %v877, 2147483648
        %v880 = vmul.f32 %v878, 1.442695
        %v881 = vpow.pop %v880
        %v882 = vmul.f32 %v879, 1.442695
        %v883 = vpow.pop %v882
        %v884 = vadd.f32 %v881, 1.0
        %v885 = vadd.f32 %v883, 1.0
        %v886 = vrcp.pop %v884
        %v887 = vmul.f32 %v884, %v886
        %v888 = vsub.f32 1.0, %v887
        %v889 = vmul.f32 %v886, %v888
        %v890 = vadd.f32 %v886, %v889
        %vm891 = vweird.f32 %v884
        %vm892 = vweird.f32 %v886
        %vm893 = vmor %vm891, %vm892
        %v894 = vsel %vm893, %v886, %v890
        %v895 = vand.u32 2147483647, %v884
        %vm896 = vcmp.eq.f32.partialorder %v895, 8.507059e+37
        %v897 = vand.u32 %v884, 2147483648
        %v898 = vor.u32 1.1754944e-38, %v897
        %v899 = vsel %vm896, %v898, %v894
        %v900 = vmul.f32 1.0, %v899
        %v901 = vrcp.pop %v885
        %v902 = vmul.f32 %v885, %v901
        %v903 = vsub.f32 1.0, %v902
        %v904 = vmul.f32 %v901, %v903
        %v905 = vadd.f32 %v901, %v904
        %vm906 = vweird.f32 %v885
        %vm907 = vweird.f32 %v901
        %vm908 = vmor %vm906, %vm907
        %v909 = vsel %vm908, %v901, %v905
        %v910 = vand.u32 2147483647, %v885
        %vm911 = vcmp.eq.f32.partialorder %v910, 8.507059e+37
        %v912 = vand.u32 %v885, 2147483648
        %v913 = vor.u32 1.1754944e-38, %v912
        %v914 = vsel %vm911, %v913, %v909
        %v915 = vmul.f32 1.0, %v914
        %v916 = vmul.f32 %v876, %v900
        %v917 = vmul.f32 %v877, %v915
        %s918 = scalar_lea.vmem [#allocation13], 128
        %v919 = vld [vmem:[%s918] sm:$0xff]
        %v920 = vld [vmem:[%s918 + $0x8] sm:$0xff]
        %v921 = vld [vmem:[%s918 + $0x10] sm:$0xff]
        %v922 = vld [vmem:[%s918 + $0x18] sm:$0xff]
        %v923 = vld [vmem:[%s918 + $0x20] sm:$0xff]
        %v924 = vld [vmem:[%s918 + $0x28] sm:$0xff]
        %v925 = vld [vmem:[%s918 + $0x30] sm:$0xff]
        %v926 = vld [vmem:[%s918 + $0x38] sm:$0xff]
        %v927 = vld [vmem:[%s918 + $0x40] sm:$0xff]
        %v928 = vld [vmem:[%s918 + $0x48] sm:$0xff]
        %v929 = vld [vmem:[%s918 + $0x50] sm:$0xff]
        %v930 = vld [vmem:[%s918 + $0x58] sm:$0xff]
        %v931 = vld [vmem:[%s918 + $0x60] sm:$0xff]
        %v932 = vld [vmem:[%s918 + $0x68] sm:$0xff]
        %v933 = vld [vmem:[%s918 + $0x70] sm:$0xff]
        %v934 = vld [vmem:[%s918 + $0x78] sm:$0xff]
        %v935 = vrot.slane %v916, 7
        %v936 = vrot.slane %v917, 7
        %v937 = vsel %vm669, %v935, %v936
        %v938 = vsel %vm669, %v936, %v935
        %v939 = vmul.f32 %v938, %v525
        %v940 = vmul.f32 %v937, %v526
        %v941 = vld [vmem:[#allocation13] sm:$0xff]
        %v942 = vld [vmem:[#allocation13 + $0x8] sm:$0xff]
        %v943 = vld [vmem:[#allocation13 + $0x10] sm:$0xff]
        %v944 = vld [vmem:[#allocation13 + $0x18] sm:$0xff]
        %v945 = vld [vmem:[#allocation13 + $0x20] sm:$0xff]
        %v946 = vld [vmem:[#allocation13 + $0x28] sm:$0xff]
        %v947 = vld [vmem:[#allocation13 + $0x30] sm:$0xff]
        %v948 = vld [vmem:[#allocation13 + $0x38] sm:$0xff]
        %v949 = vld [vmem:[#allocation13 + $0x40] sm:$0xff]
        %v950 = vld [vmem:[#allocation13 + $0x48] sm:$0xff]
        %v951 = vld [vmem:[#allocation13 + $0x50] sm:$0xff]
        %v952 = vld [vmem:[#allocation13 + $0x58] sm:$0xff]
        %v953 = vld [vmem:[#allocation13 + $0x60] sm:$0xff]
        %v954 = vld [vmem:[#allocation13 + $0x68] sm:$0xff]
        %v955 = vld [vmem:[#allocation13 + $0x70] sm:$0xff]
        %v956 = vld [vmem:[#allocation13 + $0x78] sm:$0xff]
        %957 = vmatpush.msra.mxu0 %v956
        %958 = vmatpush.msra.mxu0 %v955
        %959 = vmatpush.msra.mxu0 %v954
        %960 = vmatpush.msra.mxu0 %v953
        %961 = vmatpush.msra.mxu0 %v952
        %962 = vmatpush.msra.mxu0 %v951
        %963 = vmatpush.msra.mxu0 %v950
        %964 = vmatpush.msra.mxu0 %v949
        %965 = vmatpush.msra.mxu0 %v948
        %966 = vmatpush.msra.mxu0 %v947
        %967 = vmatpush.msra.mxu0 %v946
        %968 = vmatpush.msra.mxu0 %v945
        %969 = vmatpush.msra.mxu0 %v944
        %970 = vmatpush.msra.mxu0 %v943
        %971 = vmatpush.msra.mxu0 %v942
        %972 = vmatpush.msra.mxu0 %v941
        %973 = vmatmul.f32.gmra.mxu0 %v939
        %v974 = vpop.f32.mrf.mxu0
        %v975 = vadd.f32 0.0, %v974
        %976 = vmatmul.f32.gmra.mxu0 %v940
        %v977 = vpop.f32.mrf.mxu0
        %v978 = vadd.f32 0.0, %v977
        %979 = vdwg.mxu0
        %980 = vmatpush.msra.mxu0 %v934
        %981 = vmatpush.msra.mxu0 %v933
        %982 = vmatpush.msra.mxu0 %v932
        %983 = vmatpush.msra.mxu0 %v931
        %984 = vmatpush.msra.mxu0 %v930
        %985 = vmatpush.msra.mxu0 %v929
        %986 = vmatpush.msra.mxu0 %v928
        %987 = vmatpush.msra.mxu0 %v927
        %988 = vmatpush.msra.mxu0 %v926
        %989 = vmatpush.msra.mxu0 %v925
        %990 = vmatpush.msra.mxu0 %v924
        %991 = vmatpush.msra.mxu0 %v923
        %992 = vmatpush.msra.mxu0 %v922
        %993 = vmatpush.msra.mxu0 %v921
        %994 = vmatpush.msra.mxu0 %v920
        %995 = vmatpush.msra.mxu0 %v919
        %996 = vmatmul.f32.gmra.mxu0 %v916
        %v997 = vpop.f32.mrf.mxu0
        %v998 = vadd.f32 %v975, %v997
        %999 = vmatmul.f32.gmra.mxu0 %v917
        %v1000 = vpop.f32.mrf.mxu0
        %v1001 = vadd.f32 %v978, %v1000
        %1002 = vdwg.mxu0
        %v1003 = vrot.slane %v916, 1
        %v1004 = vrot.slane %v917, 1
        %v1005 = vsel %vm742, %v1003, %v1004
        %v1006 = vsel %vm742, %v1004, %v1003
        %v1007 = vmul.f32 %v1005, %v531
        %v1008 = vmul.f32 %v1006, %v532
        %s1009 = scalar_lea.vmem [#allocation13], 256
        %v1010 = vld [vmem:[%s1009] sm:$0xff]
        %v1011 = vld [vmem:[%s1009 + $0x8] sm:$0xff]
        %v1012 = vld [vmem:[%s1009 + $0x10] sm:$0xff]
        %v1013 = vld [vmem:[%s1009 + $0x18] sm:$0xff]
        %v1014 = vld [vmem:[%s1009 + $0x20] sm:$0xff]
        %v1015 = vld [vmem:[%s1009 + $0x28] sm:$0xff]
        %v1016 = vld [vmem:[%s1009 + $0x30] sm:$0xff]
        %v1017 = vld [vmem:[%s1009 + $0x38] sm:$0xff]
        %v1018 = vld [vmem:[%s1009 + $0x40] sm:$0xff]
        %v1019 = vld [vmem:[%s1009 + $0x48] sm:$0xff]
        %v1020 = vld [vmem:[%s1009 + $0x50] sm:$0xff]
        %v1021 = vld [vmem:[%s1009 + $0x58] sm:$0xff]
        %v1022 = vld [vmem:[%s1009 + $0x60] sm:$0xff]
        %v1023 = vld [vmem:[%s1009 + $0x68] sm:$0xff]
        %v1024 = vld [vmem:[%s1009 + $0x70] sm:$0xff]
        %v1025 = vld [vmem:[%s1009 + $0x78] sm:$0xff]
        %1026 = vmatpush.msra.mxu0 %v1025
        %1027 = vmatpush.msra.mxu0 %v1024
        %1028 = vmatpush.msra.mxu0 %v1023
        %1029 = vmatpush.msra.mxu0 %v1022
        %1030 = vmatpush.msra.mxu0 %v1021
        %1031 = vmatpush.msra.mxu0 %v1020
        %1032 = vmatpush.msra.mxu0 %v1019
        %1033 = vmatpush.msra.mxu0 %v1018
        %1034 = vmatpush.msra.mxu0 %v1017
        %1035 = vmatpush.msra.mxu0 %v1016
        %1036 = vmatpush.msra.mxu0 %v1015
        %1037 = vmatpush.msra.mxu0 %v1014
        %1038 = vmatpush.msra.mxu0 %v1013
        %1039 = vmatpush.msra.mxu0 %v1012
        %1040 = vmatpush.msra.mxu0 %v1011
        %1041 = vmatpush.msra.mxu0 %v1010
        %1042 = vmatmul.f32.gmra.mxu0 %v1007
        %v1043 = vpop.f32.mrf.mxu0
        %v1044 = vadd.f32 0.0, %v1043
        %1045 = vmatmul.f32.gmra.mxu0 %v1008
        %v1046 = vpop.f32.mrf.mxu0
        %v1047 = vadd.f32 0.0, %v1046
        %1048 = vdwg.mxu0
        %v1049 = vadd.f32 %v998, %v1044
        %v1050 = vadd.f32 %v1001, %v1047
        %v1051 = vld [vmem:[%s8] sm:$0x1]
        %v1053 = vperm.slane %v1051, 0
        %v1055 = vadd.f32 %v1049, %v1053
        %v1056 = vadd.f32 %v1050, %v1053
        %v1057 = vld [vmem:[#allocation14] sm:$0xff]
        %v1058 = vld [vmem:[#allocation14 + $0x8] sm:$0xff]
        %v1059 = vld [vmem:[#allocation14 + $0x10] sm:$0xff]
        %v1060 = vld [vmem:[#allocation14 + $0x18] sm:$0xff]
        %v1061 = vld [vmem:[#allocation14 + $0x20] sm:$0xff]
        %v1062 = vld [vmem:[#allocation14 + $0x28] sm:$0xff]
        %v1063 = vld [vmem:[#allocation14 + $0x30] sm:$0xff]
        %v1064 = vld [vmem:[#allocation14 + $0x38] sm:$0xff]
        %v1066 = vsel %vm543, %v516, 0
        %v1069 = vsel %vm543, %v517, 0
        %1071 = vmatpush.msra.mxu0 0.0
        %1072 = vmatpush.msra.mxu0 0.0
        %1073 = vmatpush.msra.mxu0 0.0
        %1074 = vmatpush.msra.mxu0 0.0
        %1075 = vmatpush.msra.mxu0 0.0
        %1076 = vmatpush.msra.mxu0 0.0
        %1077 = vmatpush.msra.mxu0 0.0
        %1078 = vmatpush.msra.mxu0 0.0
        %1079 = vmatpush.msra.mxu0 %v1064
        %1080 = vmatpush.msra.mxu0 %v1063
        %1081 = vmatpush.msra.mxu0 %v1062
        %1082 = vmatpush.msra.mxu0 %v1061
        %1083 = vmatpush.msra.mxu0 %v1060
        %1084 = vmatpush.msra.mxu0 %v1059
        %1085 = vmatpush.msra.mxu0 %v1058
        %1086 = vmatpush.msra.mxu0 %v1057
        %1087 = vmatmul.f32.gmra.mxu0 %v1066
        %v1088 = vpop.f32.mrf.mxu0
        %v1089 = vadd.f32 0.0, %v1088
        %1090 = vmatmul.f32.gmra.mxu0 %v1069
        %v1091 = vpop.f32.mrf.mxu0
        %v1092 = vadd.f32 0.0, %v1091
        %1093 = vdwg.mxu0
        %v1094 = vadd.f32 %v1055, %v1089
        %v1095 = vadd.f32 %v1056, %v1092
        %1096 = vst [vmem:[%s515] sm:$0xff] %v1094
        %1097 = vst [vmem:[%s515 + $0x8] sm:$0xff] %v1095
        %s1098 = sand.u32 %s261, 1
        %s1099 = scalar_lea.sflag [#allocation4], %s1098
        %s1100 = sand.u32 %s261, 1
        %s1101 = smul.addr %s1100, 16
        %s1102 = scalar_lea.vmem [#allocation16], %s1101
        // Predicated region
        $region93: #{tpu_custom_call.1} parent=59 // pred_check
          %p1103 = pneg %p271
        $region94: #{tpu_custom_call.1} parent=59 // pred_check_branch
          %1105 = sbr.rel (%p1103) target = $region96
        $region95: #{tpu_custom_call.1} parent=59 // pred_region
          %1107 = vsyncadd %s1099, 0
          %s1108 = smul.addr %s33, 2
          %s1109 = smul.addr %s1108, 8
          %s1110 = scalar_lea.hbm %s10, %s1109
          %s1111 = sshll.u32 %s1102, 4
          %s1112 = int_to_ptr.vmem [resolvable:$true] %s1111
          %s1113 = sshll.u32 %s1110, 4
          %s1114 = int_to_ptr.hbm [resolvable:$true] %s1113
          %1119 = dma.vmem_to_hbm [thread:$0]  %s1112, 256, %s1114, %s1099, 128, 128, 8
        $region96: #{tpu_custom_call.1} parent=59 // pred_fallthru
          _
      $region60: #{tpu_custom_call.1} parent=5 // pred_fallthru
        _
      %p1120 = scmp.le.s32.totalorder 2, %s28
      // Predicated region
      $region97: #{tpu_custom_call.1} parent=5 // pred_check
        %p1121 = pneg %p1120
      $region98: #{tpu_custom_call.1} parent=5 // pred_check_branch
        %1123 = sbr.rel (%p1121) target = $region100
      $region99: #{tpu_custom_call.1} parent=5 // pred_region
        %s1124 = ssub.s32 %s28, 2
        // Predicated region
        $region101: #{tpu_custom_call.1} parent=99 // pred_check
          %p1125 = pneg %p277
        $region102: #{tpu_custom_call.1} parent=99 // pred_check_branch
          %1127 = sbr.rel (%p1125) target = $region104
        $region103: #{tpu_custom_call.1} parent=99 // pred_region
          %s1128 = sand.u32 %s262, 1
          %s1129 = scalar_lea.sflag [#allocation4], %s1128
          %s1130 = sand.u32 %s262, 1
          %s1131 = smul.addr %s1130, 16
          %s1132 = scalar_lea.vmem [#allocation16], %s1131
          %1134 = dma.done %s1129, 256
        $region104: #{tpu_custom_call.1} parent=99 // pred_fallthru
          _
      $region100: #{tpu_custom_call.1} parent=5 // pred_fallthru
        _
    $region6: #{tpu_custom_call.1} parent=1 // loop_footer
      %s32 = sadd.s32 1, %s28
    $region7: #{tpu_custom_call.1} parent=1 // loop_footer_branch
      %27 = sbr.rel target = $region3
    $region8: #{tpu_custom_call.1} parent=1 // loop_exit
      _
    %1135 = vsyncpa [#allocation3], 1
    %s1136 = scalar_lea.sflag [#allocation3], 1
    %1137 = vsyncpa %s1136, 1
    %1138 = vsyncpa [#allocation6], 1
    %s1139 = scalar_lea.sflag [#allocation6], 1
    %1140 = vsyncpa %s1139, 1
    %1141 = vsyncpa [#allocation9], 1
    %1142 = vsyncpa [#allocation12], 1
    %1143 = vsyncpa [#allocation15], 1
    %1144 = vsyncpa [#allocation4], 1
    %s1145 = scalar_lea.sflag [#allocation4], 1
    %1146 = vsyncpa %s1145, 1

</llo_original>
